<compile_context>
chip_gen: v6e
topology: v6e:2x2x1
jax: 0.10.0
libtpu: 0.0.40
codegen_flags: <defaults>
</compile_context>

<pallas_src>
import functools
import math

import jax
import jax.numpy as jnp
import numpy as np
from jax.experimental import pallas as pl
from jax.experimental.pallas import tpu as pltpu


def _mha_kernel(xq_ref, xkv_ref, bias_ref,
                wq_ref, bq_ref, wkv_ref, bkv_ref, wo_ref, bo_ref,
                o_ref, acc_ref, *, heads_per_block, head_dim):
    hb = pl.program_id(2)
    D = head_dim
    HBD = heads_per_block * D

    @pl.when(hb == 0)
    def _():
        acc_ref[...] = jnp.zeros_like(acc_ref)

    xq = xq_ref[0]                       # [TQ, C] bf16 (this query tile)
    xkv = xkv_ref[0]                     # [L,  C] bf16 (all rows, for K/V)

    # Q projection for this head block.  Softmax scale is already folded into
    # wq/bq in the wrapper.  bf16 x bf16 -> fp32 accumulation on the MXU.
    q = (jnp.dot(xq, wq_ref[0], preferred_element_type=jnp.float32)
         + bq_ref[0]).astype(jnp.bfloat16)                            # [TQ, HBD]

    # Fused K/V projection for all rows of this head block (N = 2*HBD).
    kv = (jnp.dot(xkv, wkv_ref[0], preferred_element_type=jnp.float32)
          + bkv_ref[0])                                               # [L, 2*HBD]
    k = kv[:, :HBD].astype(jnp.bfloat16)                              # aligned split
    v = kv[:, HBD:].astype(jnp.bfloat16)

    bias = bias_ref[...].astype(jnp.float32)                          # [TQ, L]

    outs = []
    for j in range(heads_per_block):                                  # unrolled
        sl = slice(j * D, (j + 1) * D)
        scores = jax.lax.dot_general(
            q[:, sl], k[:, sl],
            dimension_numbers=(((1,), (1,)), ((), ())),
            preferred_element_type=jnp.float32) + bias                # [TQ, L]
        m = jnp.max(scores, axis=-1, keepdims=True)
        p = jnp.exp(scores - m)
        s = jnp.sum(p, axis=-1, keepdims=True)
        out_j = jnp.dot(p.astype(jnp.bfloat16), v[:, sl],
                        preferred_element_type=jnp.float32)           # [TQ, D]
        # Normalize on the small [TQ, D] output, not the [TQ, L] probabilities.
        outs.append(out_j * pl.reciprocal(s, approx=True))

    out_block = outs[0] if heads_per_block == 1 else jnp.concatenate(outs, -1)

    # Per-head-block contribution to the output projection (contraction K=HBD),
    # accumulated in fp32 across head blocks.
    acc_ref[...] += jnp.dot(out_block.astype(jnp.bfloat16), wo_ref[0],
                            preferred_element_type=jnp.float32)       # [TQ, C]

    @pl.when(hb == pl.num_programs(2) - 1)
    def _():
        o_ref[0] = (acc_ref[...] + bo_ref[...]).astype(o_ref.dtype)


def _vmem_limit_bytes():
    """Per-generation scoped-VMEM limit: ~96 MiB on v5e/v6e, <=48 MiB on v7x."""
    try:
        cap = int(pltpu.get_tpu_info().vmem_capacity_bytes)
        return max(32 * 1024 * 1024, min(cap * 3 // 4, 100 * 1024 * 1024))
    except Exception:
        return 48 * 1024 * 1024  # safe everywhere (incl. v7x's 64 MiB physical)


def _pick_heads_per_block(H, D, target=256):
    """Smallest divisor of H with HB*D >= target (MXU width), else H."""
    hb_best = 1
    for hb in range(1, H + 1):
        if H % hb == 0:
            hb_best = hb
            if hb * D >= target:
                break
    return hb_best


def _pick_query_tile(L, target):
    if L <= target:
        return L
    for tq in range(target, 7, -1):          # prefer multiples of 8 (sublane)
        if L % tq == 0 and tq % 8 == 0:
            return tq
    for tq in range(target, 0, -1):
        if L % tq == 0:
            return tq
    return L


def custom_mha_forward(x, attn_bias, params, num_heads):
    """x: [B, L, C] f32; attn_bias: [L, L] additive bias; params: torch-style."""
    B, L, C = x.shape
    H = num_heads
    D = C // H
    scale = 0.25 / math.sqrt(D)

    vmem_limit = _vmem_limit_bytes()
    HB = _pick_heads_per_block(H, D)
    NHB = H // HB
    HBD = HB * D
    TQ = _pick_query_tile(L, 512 if vmem_limit > 64 * 1024 * 1024 else 256)
    NQ = L // TQ

    # --- wrapper-side weight prep (one-time constant folds under XLA) ------
    # PyTorch Linear weights are [out, in]; transpose to [in, out], fold the
    # softmax scale into Wq/bq, group per head block so BlockSpec delivers a
    # contiguous slice per grid step, and cast matmul weights / x / bias to
    # bf16 (half the DMA bytes, MXU-native rate).
    f32 = jnp.float32
    wq = ((params["wq"].T.astype(f32) * scale).reshape(C, NHB, HBD)
          .transpose(1, 0, 2).astype(jnp.bfloat16))                   # [NHB, C, HBD]
    bq = (params["bq"].astype(f32) * scale).reshape(NHB, 1, HBD)
    wk = params["wk"].T.reshape(C, NHB, HBD)
    wv = params["wv"].T.reshape(C, NHB, HBD)
    wkv = (jnp.concatenate([wk, wv], axis=-1)
           .transpose(1, 0, 2).astype(jnp.bfloat16))                  # [NHB, C, 2*HBD]
    bkv = jnp.concatenate([params["bk"].reshape(NHB, HBD),
                           params["bv"].reshape(NHB, HBD)],
                          axis=-1).reshape(NHB, 1, 2 * HBD).astype(f32)
    wo = params["wo"].T.reshape(NHB, HBD, C).astype(jnp.bfloat16)     # [NHB, HBD, C]
    bo = params["bo"].reshape(1, C).astype(f32)

    x_bf = x.astype(jnp.bfloat16)
    bias_bf = attn_bias.astype(jnp.bfloat16)

    kernel = functools.partial(_mha_kernel, heads_per_block=HB, head_dim=D)

    return pl.pallas_call(
        kernel,
        out_shape=jax.ShapeDtypeStruct((B, L, C), x.dtype),
        grid=(B, NQ, NHB),
        in_specs=[
            pl.BlockSpec((1, TQ, C), lambda b, q, h: (b, q, 0)),        # x (Q rows)
            pl.BlockSpec((1, L, C), lambda b, q, h: (b, 0, 0)),         # x (K/V rows)
            pl.BlockSpec((TQ, L), lambda b, q, h: (q, 0)),              # bias tile
            pl.BlockSpec((1, C, HBD), lambda b, q, h: (h, 0, 0)),       # Wq[block]
            pl.BlockSpec((1, 1, HBD), lambda b, q, h: (h, 0, 0)),       # bq[block]
            pl.BlockSpec((1, C, 2 * HBD), lambda b, q, h: (h, 0, 0)),   # Wkv[block]
            pl.BlockSpec((1, 1, 2 * HBD), lambda b, q, h: (h, 0, 0)),   # bkv[block]
            pl.BlockSpec((1, HBD, C), lambda b, q, h: (h, 0, 0)),       # Wo[block]
            pl.BlockSpec((1, C), lambda b, q, h: (0, 0)),               # bo
        ],
        out_specs=pl.BlockSpec((1, TQ, C), lambda b, q, h: (b, q, 0)),
        scratch_shapes=[pltpu.VMEM((TQ, C), jnp.float32)],              # head-block acc
        compiler_params=pltpu.CompilerParams(
            dimension_semantics=("parallel", "parallel", "arbitrary"),
            vmem_limit_bytes=vmem_limit),
    )(x_bf, x_bf, bias_bf, wq, bq, wkv, bkv, wo, bo)


def _reference(x, attn_bias, params, num_heads):
    """Plain-JAX fp32 reference mirroring the PyTorch slow_attn path."""
    B, L, C = x.shape
    D = C // num_heads
    scale = 0.25 / math.sqrt(D)
    q = x @ params["wq"].T + params["bq"]
    k = x @ params["wk"].T + params["bk"]
    v = x @ params["wv"].T + params["bv"]
    q = q.reshape(B, L, num_heads, D).transpose(0, 2, 1, 3)
    k = k.reshape(B, L, num_heads, D).transpose(0, 2, 1, 3)
    v = v.reshape(B, L, num_heads, D).transpose(0, 2, 1, 3)
    scores = jnp.einsum("bhqd,bhkd->bhqk", q, k) * scale + attn_bias[None, None]
    p = jax.nn.softmax(scores, axis=-1)
    out = jnp.einsum("bhqk,bhkd->bhqd", p, v)
    out = out.transpose(0, 2, 1, 3).reshape(B, L, C)
    return out @ params["wo"].T + params["bo"]


if __name__ == "__main__":
    B, L, C, H = 2, 8, 32, 4  # batch, seq, embed_dim, num_heads (head_dim = 8)

    key = jax.random.PRNGKey(0)
    keys = jax.random.split(key, 11)
    init = lambda k, shape, s: (jax.random.normal(k, shape, jnp.float32) * s)

    params = {
        "wq": init(keys[0], (C, C), 0.1), "bq": init(keys[1], (C,), 0.05),
        "wk": init(keys[2], (C, C), 0.1), "bk": init(keys[3], (C,), 0.05),
        "wv": init(keys[4], (C, C), 0.1), "bv": init(keys[5], (C,), 0.05),
        "wo": init(keys[6], (C, C), 0.1), "bo": init(keys[7], (C,), 0.05),
    }
    x = init(keys[8], (B, L, C), 1.0)
    # Causal additive bias (like a typical attn_bias passed to the module).
    causal = jnp.tril(jnp.ones((L, L), jnp.float32))
    attn_bias = jnp.where(causal == 1, 0.0, -1e9).astype(jnp.float32)

    out = custom_mha_forward(x, attn_bias, params, num_heads=H)
    out = jax.block_until_ready(out)

    ref = _reference(x, attn_bias, params, num_heads=H)
    # All matmuls (projections + attention) run bf16 with fp32 accumulation and
    # the softmax denominator uses the approx EUP reciprocal, so the tolerance
    # is relaxed accordingly.
    np.testing.assert_allclose(np.asarray(out), np.asarray(ref),
                               rtol=3e-2, atol=2e-2)

    print("KERNEL_OK")
</pallas_src>

<mosaic_0001>
module attributes {stable_mosaic.version = 11 : i64} {
  func.func @_mha_kernel(%arg0: i32, %arg1: i32, %arg2: i32, %arg3: memref<1x8x32xbf16, #tpu.memory_space<vmem>>, %arg4: memref<1x8x32xbf16, #tpu.memory_space<vmem>>, %arg5: memref<8x8xbf16, #tpu.memory_space<vmem>>, %arg6: memref<1x32x32xbf16, #tpu.memory_space<vmem>>, %arg7: memref<1x1x32xf32, #tpu.memory_space<vmem>>, %arg8: memref<1x32x64xbf16, #tpu.memory_space<vmem>>, %arg9: memref<1x1x64xf32, #tpu.memory_space<vmem>>, %arg10: memref<1x32x32xbf16, #tpu.memory_space<vmem>>, %arg11: memref<1x32xf32, #tpu.memory_space<vmem>>, %arg12: memref<1x8x32xf32, #tpu.memory_space<vmem>>, %arg13: memref<8x32xf32, #tpu.memory_space<vmem>>) attributes {dimension_semantics = [#tpu.dimension_semantics<parallel>, #tpu.dimension_semantics<parallel>, #tpu.dimension_semantics<arbitrary>], iteration_bounds = array<i64: 2, 1, 1>, scalar_prefetch = 0 : i64, scratch_operands = 1 : i64, tpu.core_type = #tpu.core_type<tc>, window_params = [{transform_indices = @transform_0, window_bounds = array<i64: 1, 8, 32>}, {transform_indices = @transform_1, window_bounds = array<i64: 1, 8, 32>}, {transform_indices = @transform_2, window_bounds = array<i64: 8, 8>}, {transform_indices = @transform_3, window_bounds = array<i64: 1, 32, 32>}, {transform_indices = @transform_4, window_bounds = array<i64: 1, 1, 32>}, {transform_indices = @transform_5, window_bounds = array<i64: 1, 32, 64>}, {transform_indices = @transform_6, window_bounds = array<i64: 1, 1, 64>}, {transform_indices = @transform_7, window_bounds = array<i64: 1, 32, 32>}, {pipeline_mode = #tpu.pipeline_mode<synchronous>, transform_indices = @transform_8, window_bounds = array<i64: 1, 32>}, {transform_indices = @transform_9, window_bounds = array<i64: 1, 8, 32>}]} {
    %c0_i32 = arith.constant 0 : i32
    %0 = arith.cmpi eq, %arg2, %c0_i32 : i32
    %1 = arith.extui %0 : i1 to i32
    %c0_i32_0 = arith.constant 0 : i32
    %2 = arith.cmpi ne, %1, %c0_i32_0 : i32
    scf.if %2 {
      %cst_47 = arith.constant 0.000000e+00 : f32
      %107 = vector.broadcast %cst_47 : f32 to vector<8x32xf32>
      %c0_48 = arith.constant 0 : index
      %c0_49 = arith.constant 0 : index
      %108 = vector.load %arg13[%c0_48, %c0_49] : memref<8x32xf32, #tpu.memory_space<vmem>>, vector<8x32xf32>
      tpu.vector_store %arg13[%c0_48, %c0_49], %107 {strides = array<i32>} : memref<8x32xf32, #tpu.memory_space<vmem>>, vector<8x32xf32>,
    } else {
    }
    %c0 = arith.constant 0 : index
    %c0_1 = arith.constant 0 : index
    %c0_2 = arith.constant 0 : index
    %3 = vector.load %arg3[%c0, %c0_1, %c0_2] : memref<1x8x32xbf16, #tpu.memory_space<vmem>>, vector<1x8x32xbf16>
    %4 = vector.shape_cast %3 : vector<1x8x32xbf16> to vector<8x32xbf16>
    %c0_3 = arith.constant 0 : index
    %c0_4 = arith.constant 0 : index
    %c0_5 = arith.constant 0 : index
    %5 = vector.load %arg4[%c0_3, %c0_4, %c0_5] : memref<1x8x32xbf16, #tpu.memory_space<vmem>>, vector<1x8x32xbf16>
    %6 = vector.shape_cast %5 : vector<1x8x32xbf16> to vector<8x32xbf16>
    %c0_6 = arith.constant 0 : index
    %c0_7 = arith.constant 0 : index
    %c0_8 = arith.constant 0 : index
    %7 = vector.load %arg6[%c0_6, %c0_7, %c0_8] : memref<1x32x32xbf16, #tpu.memory_space<vmem>>, vector<1x32x32xbf16>
    %8 = vector.shape_cast %7 : vector<1x32x32xbf16> to vector<32x32xbf16>
    %cst = arith.constant dense<0.000000e+00> : vector<8x32xf32>
    %9 = tpu.matmul %4, %8, %cst {dimension_numbers = #tpu.dot_dimension_numbers<[1], [0], [0], [1], [0, 0, 1, 1], [], []>} : vector<8x32xbf16>, vector<32x32xbf16>, vector<8x32xf32> -> vector<8x32xf32>
    %c0_9 = arith.constant 0 : index
    %c0_10 = arith.constant 0 : index
    %c0_11 = arith.constant 0 : index
    %10 = vector.load %arg7[%c0_9, %c0_10, %c0_11] : memref<1x1x32xf32, #tpu.memory_space<vmem>>, vector<1x1x32xf32>
    %11 = vector.shape_cast %10 : vector<1x1x32xf32> to vector<1x32xf32>
    %12 = vector.broadcast %11 : vector<1x32xf32> to vector<8x32xf32>
    %13 = arith.addf %9, %12 : vector<8x32xf32>
    %14 = arith.truncf %13 : vector<8x32xf32> to vector<8x32xbf16>
    %c0_12 = arith.constant 0 : index
    %c0_13 = arith.constant 0 : index
    %c0_14 = arith.constant 0 : index
    %15 = vector.load %arg8[%c0_12, %c0_13, %c0_14] : memref<1x32x64xbf16, #tpu.memory_space<vmem>>, vector<1x32x64xbf16>
    %16 = vector.shape_cast %15 : vector<1x32x64xbf16> to vector<32x64xbf16>
    %cst_15 = arith.constant dense<0.000000e+00> : vector<8x64xf32>
    %17 = tpu.matmul %6, %16, %cst_15 {dimension_numbers = #tpu.dot_dimension_numbers<[1], [0], [0], [1], [0, 0, 1, 1], [], []>} : vector<8x32xbf16>, vector<32x64xbf16>, vector<8x64xf32> -> vector<8x64xf32>
    %c0_16 = arith.constant 0 : index
    %c0_17 = arith.constant 0 : index
    %c0_18 = arith.constant 0 : index
    %18 = vector.load %arg9[%c0_16, %c0_17, %c0_18] : memref<1x1x64xf32, #tpu.memory_space<vmem>>, vector<1x1x64xf32>
    %19 = vector.shape_cast %18 : vector<1x1x64xf32> to vector<1x64xf32>
    %20 = vector.broadcast %19 : vector<1x64xf32> to vector<8x64xf32>
    %21 = arith.addf %17, %20 : vector<8x64xf32>
    %22 = vector.extract_strided_slice %21 {offsets = [0, 0], sizes = [8, 32], strides = [1, 1]} : vector<8x64xf32> to vector<8x32xf32>
    %23 = arith.truncf %22 : vector<8x32xf32> to vector<8x32xbf16>
    %24 = vector.extract_strided_slice %21 {offsets = [0, 32], sizes = [8, 32], strides = [1, 1]} : vector<8x64xf32> to vector<8x32xf32>
    %25 = arith.truncf %24 : vector<8x32xf32> to vector<8x32xbf16>
    %c0_19 = arith.constant 0 : index
    %c0_20 = arith.constant 0 : index
    %26 = vector.load %arg5[%c0_19, %c0_20] : memref<8x8xbf16, #tpu.memory_space<vmem>>, vector<8x8xbf16>
    %27 = arith.extf %26 : vector<8x8xbf16> to vector<8x8xf32>
    %28 = vector.extract_strided_slice %14 {offsets = [0, 0], sizes = [8, 8], strides = [1, 1]} : vector<8x32xbf16> to vector<8x8xbf16>
    %29 = vector.extract_strided_slice %23 {offsets = [0, 0], sizes = [8, 8], strides = [1, 1]} : vector<8x32xbf16> to vector<8x8xbf16>
    %cst_21 = arith.constant dense<0.000000e+00> : vector<8x8xf32>
    %30 = tpu.matmul %28, %29, %cst_21 {dimension_numbers = #tpu.dot_dimension_numbers<[1], [1], [0], [0], [0, 0, 1, 0], [], []>} : vector<8x8xbf16>, vector<8x8xbf16>, vector<8x8xf32> -> vector<8x8xf32>
    %31 = arith.addf %30, %27 : vector<8x8xf32>
    %cst_22 = arith.constant dense<0xFF800000> : vector<8xf32>
    %32 = vector.multi_reduction <maximumf>, %31, %cst_22 [1] : vector<8x8xf32> to vector<8xf32>
    %33 = vector.shape_cast %32 : vector<8xf32> to vector<8x1xf32>
    %34 = vector.broadcast %33 : vector<8x1xf32> to vector<8x8xf32>
    %35 = arith.subf %31, %34 : vector<8x8xf32>
    %36 = math.exp %35 : vector<8x8xf32>
    %cst_23 = arith.constant dense<0.000000e+00> : vector<8xf32>
    %37 = vector.multi_reduction <add>, %36, %cst_23 [1] : vector<8x8xf32> to vector<8xf32>
    %38 = vector.shape_cast %37 : vector<8xf32> to vector<8x1xf32>
    %39 = arith.truncf %36 : vector<8x8xf32> to vector<8x8xbf16>
    %40 = vector.extract_strided_slice %25 {offsets = [0, 0], sizes = [8, 8], strides = [1, 1]} : vector<8x32xbf16> to vector<8x8xbf16>
    %cst_24 = arith.constant dense<0.000000e+00> : vector<8x8xf32>
    %41 = tpu.matmul %39, %40, %cst_24 {dimension_numbers = #tpu.dot_dimension_numbers<[1], [0], [0], [1], [0, 0, 1, 1], [], []>} : vector<8x8xbf16>, vector<8x8xbf16>, vector<8x8xf32> -> vector<8x8xf32>
    %42 = tpu.reciprocal %38 {approx = true} : vector<8x1xf32> -> vector<8x1xf32>
    %43 = vector.broadcast %42 : vector<8x1xf32> to vector<8x8xf32>
    %44 = arith.mulf %41, %43 : vector<8x8xf32>
    %45 = vector.extract_strided_slice %14 {offsets = [0, 8], sizes = [8, 8], strides = [1, 1]} : vector<8x32xbf16> to vector<8x8xbf16>
    %46 = vector.extract_strided_slice %23 {offsets = [0, 8], sizes = [8, 8], strides = [1, 1]} : vector<8x32xbf16> to vector<8x8xbf16>
    %cst_25 = arith.constant dense<0.000000e+00> : vector<8x8xf32>
    %47 = tpu.matmul %45, %46, %cst_25 {dimension_numbers = #tpu.dot_dimension_numbers<[1], [1], [0], [0], [0, 0, 1, 0], [], []>} : vector<8x8xbf16>, vector<8x8xbf16>, vector<8x8xf32> -> vector<8x8xf32>
    %48 = arith.addf %47, %27 : vector<8x8xf32>
    %cst_26 = arith.constant dense<0xFF800000> : vector<8xf32>
    %49 = vector.multi_reduction <maximumf>, %48, %cst_26 [1] : vector<8x8xf32> to vector<8xf32>
    %50 = vector.shape_cast %49 : vector<8xf32> to vector<8x1xf32>
    %51 = vector.broadcast %50 : vector<8x1xf32> to vector<8x8xf32>
    %52 = arith.subf %48, %51 : vector<8x8xf32>
    %53 = math.exp %52 : vector<8x8xf32>
    %cst_27 = arith.constant dense<0.000000e+00> : vector<8xf32>
    %54 = vector.multi_reduction <add>, %53, %cst_27 [1] : vector<8x8xf32> to vector<8xf32>
    %55 = vector.shape_cast %54 : vector<8xf32> to vector<8x1xf32>
    %56 = arith.truncf %53 : vector<8x8xf32> to vector<8x8xbf16>
    %57 = vector.extract_strided_slice %25 {offsets = [0, 8], sizes = [8, 8], strides = [1, 1]} : vector<8x32xbf16> to vector<8x8xbf16>
    %cst_28 = arith.constant dense<0.000000e+00> : vector<8x8xf32>
    %58 = tpu.matmul %56, %57, %cst_28 {dimension_numbers = #tpu.dot_dimension_numbers<[1], [0], [0], [1], [0, 0, 1, 1], [], []>} : vector<8x8xbf16>, vector<8x8xbf16>, vector<8x8xf32> -> vector<8x8xf32>
    %59 = tpu.reciprocal %55 {approx = true} : vector<8x1xf32> -> vector<8x1xf32>
    %60 = vector.broadcast %59 : vector<8x1xf32> to vector<8x8xf32>
    %61 = arith.mulf %58, %60 : vector<8x8xf32>
    %62 = vector.extract_strided_slice %14 {offsets = [0, 16], sizes = [8, 8], strides = [1, 1]} : vector<8x32xbf16> to vector<8x8xbf16>
    %63 = vector.extract_strided_slice %23 {offsets = [0, 16], sizes = [8, 8], strides = [1, 1]} : vector<8x32xbf16> to vector<8x8xbf16>
    %cst_29 = arith.constant dense<0.000000e+00> : vector<8x8xf32>
    %64 = tpu.matmul %62, %63, %cst_29 {dimension_numbers = #tpu.dot_dimension_numbers<[1], [1], [0], [0], [0, 0, 1, 0], [], []>} : vector<8x8xbf16>, vector<8x8xbf16>, vector<8x8xf32> -> vector<8x8xf32>
    %65 = arith.addf %64, %27 : vector<8x8xf32>
    %cst_30 = arith.constant dense<0xFF800000> : vector<8xf32>
    %66 = vector.multi_reduction <maximumf>, %65, %cst_30 [1] : vector<8x8xf32> to vector<8xf32>
    %67 = vector.shape_cast %66 : vector<8xf32> to vector<8x1xf32>
    %68 = vector.broadcast %67 : vector<8x1xf32> to vector<8x8xf32>
    %69 = arith.subf %65, %68 : vector<8x8xf32>
    %70 = math.exp %69 : vector<8x8xf32>
    %cst_31 = arith.constant dense<0.000000e+00> : vector<8xf32>
    %71 = vector.multi_reduction <add>, %70, %cst_31 [1] : vector<8x8xf32> to vector<8xf32>
    %72 = vector.shape_cast %71 : vector<8xf32> to vector<8x1xf32>
    %73 = arith.truncf %70 : vector<8x8xf32> to vector<8x8xbf16>
    %74 = vector.extract_strided_slice %25 {offsets = [0, 16], sizes = [8, 8], strides = [1, 1]} : vector<8x32xbf16> to vector<8x8xbf16>
    %cst_32 = arith.constant dense<0.000000e+00> : vector<8x8xf32>
    %75 = tpu.matmul %73, %74, %cst_32 {dimension_numbers = #tpu.dot_dimension_numbers<[1], [0], [0], [1], [0, 0, 1, 1], [], []>} : vector<8x8xbf16>, vector<8x8xbf16>, vector<8x8xf32> -> vector<8x8xf32>
    %76 = tpu.reciprocal %72 {approx = true} : vector<8x1xf32> -> vector<8x1xf32>
    %77 = vector.broadcast %76 : vector<8x1xf32> to vector<8x8xf32>
    %78 = arith.mulf %75, %77 : vector<8x8xf32>
    %79 = vector.extract_strided_slice %14 {offsets = [0, 24], sizes = [8, 8], strides = [1, 1]} : vector<8x32xbf16> to vector<8x8xbf16>
    %80 = vector.extract_strided_slice %23 {offsets = [0, 24], sizes = [8, 8], strides = [1, 1]} : vector<8x32xbf16> to vector<8x8xbf16>
    %cst_33 = arith.constant dense<0.000000e+00> : vector<8x8xf32>
    %81 = tpu.matmul %79, %80, %cst_33 {dimension_numbers = #tpu.dot_dimension_numbers<[1], [1], [0], [0], [0, 0, 1, 0], [], []>} : vector<8x8xbf16>, vector<8x8xbf16>, vector<8x8xf32> -> vector<8x8xf32>
    %82 = arith.addf %81, %27 : vector<8x8xf32>
    %cst_34 = arith.constant dense<0xFF800000> : vector<8xf32>
    %83 = vector.multi_reduction <maximumf>, %82, %cst_34 [1] : vector<8x8xf32> to vector<8xf32>
    %84 = vector.shape_cast %83 : vector<8xf32> to vector<8x1xf32>
    %85 = vector.broadcast %84 : vector<8x1xf32> to vector<8x8xf32>
    %86 = arith.subf %82, %85 : vector<8x8xf32>
    %87 = math.exp %86 : vector<8x8xf32>
    %cst_35 = arith.constant dense<0.000000e+00> : vector<8xf32>
    %88 = vector.multi_reduction <add>, %87, %cst_35 [1] : vector<8x8xf32> to vector<8xf32>
    %89 = vector.shape_cast %88 : vector<8xf32> to vector<8x1xf32>
    %90 = arith.truncf %87 : vector<8x8xf32> to vector<8x8xbf16>
    %91 = vector.extract_strided_slice %25 {offsets = [0, 24], sizes = [8, 8], strides = [1, 1]} : vector<8x32xbf16> to vector<8x8xbf16>
    %cst_36 = arith.constant dense<0.000000e+00> : vector<8x8xf32>
    %92 = tpu.matmul %90, %91, %cst_36 {dimension_numbers = #tpu.dot_dimension_numbers<[1], [0], [0], [1], [0, 0, 1, 1], [], []>} : vector<8x8xbf16>, vector<8x8xbf16>, vector<8x8xf32> -> vector<8x8xf32>
    %93 = tpu.reciprocal %89 {approx = true} : vector<8x1xf32> -> vector<8x1xf32>
    %94 = vector.broadcast %93 : vector<8x1xf32> to vector<8x8xf32>
    %95 = arith.mulf %92, %94 : vector<8x8xf32>
    %96 = tpu.concatenate %44, %61, %78, %95 in 1 : vector<8x8xf32>, vector<8x8xf32>, vector<8x8xf32>, vector<8x8xf32> -> vector<8x32xf32>
    %c0_37 = arith.constant 0 : index
    %c0_38 = arith.constant 0 : index
    %97 = vector.load %arg13[%c0_37, %c0_38] : memref<8x32xf32, #tpu.memory_space<vmem>>, vector<8x32xf32>
    %98 = arith.truncf %96 : vector<8x32xf32> to vector<8x32xbf16>
    %c0_39 = arith.constant 0 : index
    %c0_40 = arith.constant 0 : index
    %c0_41 = arith.constant 0 : index
    %99 = vector.load %arg10[%c0_39, %c0_40, %c0_41] : memref<1x32x32xbf16, #tpu.memory_space<vmem>>, vector<1x32x32xbf16>
    %100 = vector.shape_cast %99 : vector<1x32x32xbf16> to vector<32x32xbf16>
    %cst_42 = arith.constant dense<0.000000e+00> : vector<8x32xf32>
    %101 = tpu.matmul %98, %100, %cst_42 {dimension_numbers = #tpu.dot_dimension_numbers<[1], [0], [0], [1], [0, 0, 1, 1], [], []>} : vector<8x32xbf16>, vector<32x32xbf16>, vector<8x32xf32> -> vector<8x32xf32>
    %102 = arith.addf %97, %101 : vector<8x32xf32>
    %c0_43 = arith.constant 0 : index
    %c0_44 = arith.constant 0 : index
    %103 = vector.load %arg13[%c0_43, %c0_44] : memref<8x32xf32, #tpu.memory_space<vmem>>, vector<8x32xf32>
    tpu.vector_store %arg13[%c0_43, %c0_44], %102 {strides = array<i32>} : memref<8x32xf32, #tpu.memory_space<vmem>>, vector<8x32xf32>,
    %c0_i32_45 = arith.constant 0 : i32
    %104 = arith.cmpi eq, %arg2, %c0_i32_45 : i32
    %105 = arith.extui %104 : i1 to i32
    %c0_i32_46 = arith.constant 0 : i32
    %106 = arith.cmpi ne, %105, %c0_i32_46 : i32
    scf.if %106 {
      %c0_47 = arith.constant 0 : index
      %c0_48 = arith.constant 0 : index
      %107 = vector.load %arg13[%c0_47, %c0_48] : memref<8x32xf32, #tpu.memory_space<vmem>>, vector<8x32xf32>
      %c0_49 = arith.constant 0 : index
      %c0_50 = arith.constant 0 : index
      %108 = vector.load %arg11[%c0_49, %c0_50] : memref<1x32xf32, #tpu.memory_space<vmem>>, vector<1x32xf32>
      %109 = vector.broadcast %108 : vector<1x32xf32> to vector<8x32xf32>
      %110 = arith.addf %107, %109 : vector<8x32xf32>
      %c0_51 = arith.constant 0 : index
      %c0_52 = arith.constant 0 : index
      %c0_53 = arith.constant 0 : index
      %111 = vector.load %arg12[%c0_51, %c0_52, %c0_53] : memref<1x8x32xf32, #tpu.memory_space<vmem>>, vector<1x8x32xf32>
      %112 = vector.shape_cast %111 : vector<1x8x32xf32> to vector<8x32xf32>
      %113 = vector.shape_cast %110 : vector<8x32xf32> to vector<1x8x32xf32>
      tpu.vector_store %arg12[%c0_51, %c0_52, %c0_53], %113 {strides = array<i32>} : memref<1x8x32xf32, #tpu.memory_space<vmem>>, vector<1x8x32xf32>,
    } else {
    }
    return
  }
  func.func @transform_0(%arg0: i32, %arg1: i32, %arg2: i32) -> (i32, i32, i32) {
    %c0_i32 = arith.constant 0 : i32
    %c0_i32_0 = arith.constant 0 : i32
    return %arg0, %arg1, %c0_i32 : i32, i32, i32
  }
  func.func @transform_1(%arg0: i32, %arg1: i32, %arg2: i32) -> (i32, i32, i32) {
    %c0_i32 = arith.constant 0 : i32
    %c0_i32_0 = arith.constant 0 : i32
    %c0_i32_1 = arith.constant 0 : i32
    return %arg0, %c0_i32, %c0_i32_0 : i32, i32, i32
  }
  func.func @transform_2(%arg0: i32, %arg1: i32, %arg2: i32) -> (i32, i32) {
    %c0_i32 = arith.constant 0 : i32
    %c0_i32_0 = arith.constant 0 : i32
    return %arg1, %c0_i32 : i32, i32
  }
  func.func @transform_3(%arg0: i32, %arg1: i32, %arg2: i32) -> (i32, i32, i32) {
    %c0_i32 = arith.constant 0 : i32
    %c0_i32_0 = arith.constant 0 : i32
    %c0_i32_1 = arith.constant 0 : i32
    return %arg2, %c0_i32, %c0_i32_0 : i32, i32, i32
  }
  func.func @transform_4(%arg0: i32, %arg1: i32, %arg2: i32) -> (i32, i32, i32) {
    %c0_i32 = arith.constant 0 : i32
    %c0_i32_0 = arith.constant 0 : i32
    %c0_i32_1 = arith.constant 0 : i32
    return %arg2, %c0_i32, %c0_i32_0 : i32, i32, i32
  }
  func.func @transform_5(%arg0: i32, %arg1: i32, %arg2: i32) -> (i32, i32, i32) {
    %c0_i32 = arith.constant 0 : i32
    %c0_i32_0 = arith.constant 0 : i32
    %c0_i32_1 = arith.constant 0 : i32
    return %arg2, %c0_i32, %c0_i32_0 : i32, i32, i32
  }
  func.func @transform_6(%arg0: i32, %arg1: i32, %arg2: i32) -> (i32, i32, i32) {
    %c0_i32 = arith.constant 0 : i32
    %c0_i32_0 = arith.constant 0 : i32
    %c0_i32_1 = arith.constant 0 : i32
    return %arg2, %c0_i32, %c0_i32_0 : i32, i32, i32
  }
  func.func @transform_7(%arg0: i32, %arg1: i32, %arg2: i32) -> (i32, i32, i32) {
    %c0_i32 = arith.constant 0 : i32
    %c0_i32_0 = arith.constant 0 : i32
    %c0_i32_1 = arith.constant 0 : i32
    return %arg2, %c0_i32, %c0_i32_0 : i32, i32, i32
  }
  func.func @transform_8(%arg0: i32, %arg1: i32, %arg2: i32) -> (i32, i32) {
    %c0_i32 = arith.constant 0 : i32
    %c0_i32_0 = arith.constant 0 : i32
    %c0_i32_1 = arith.constant 0 : i32
    return %c0_i32, %c0_i32_0 : i32, i32
  }
  func.func @transform_9(%arg0: i32, %arg1: i32, %arg2: i32) -> (i32, i32, i32) {
    %c0_i32 = arith.constant 0 : i32
    %c0_i32_0 = arith.constant 0 : i32
    return %arg0, %arg1, %c0_i32 : i32, i32, i32
  }
}

</mosaic_0001>

<llo_original>
// kernel: tpu_custom_call.1
$region0: #{tpu_custom_call.1}
  #allocation0 [shape = 'u32[]', space=smem, size = 0x4, offset = 0x4, fixed_abs, tag = 'smem constant byte address 0x4 - core index']
  #allocation1 [shape = 'u32[144,128]{1,0:T(1,128)}', space=vmem, size = 0x12000, scoped, tag = 'internal scratch']
  #allocation2 [shape = 'f32[8,32]{1,0:T(8,128)}', space=vmem, size = 0x1000, scoped, tag = 'scratch operand']
  %s0 = inlined_call_operand.hbm [shape: bf16[2,8,32], index: 0, kind: input, shape index: {}]
  %s1 = inlined_call_operand.hbm [shape: bf16[2,8,32], index: 1, kind: input, shape index: {}]
  %s2 = inlined_call_operand.hbm [shape: bf16[8,8], index: 2, kind: input, shape index: {}]
  %s3 = inlined_call_operand.hbm [shape: bf16[1,32,32], index: 3, kind: input, shape index: {}]
  %s4 = inlined_call_operand.vmem [shape: f32[1,1,32], index: 4, kind: input, shape index: {}]
  %s5 = inlined_call_operand.hbm [shape: bf16[1,32,64], index: 5, kind: input, shape index: {}]
  %s6 = inlined_call_operand.vmem [shape: f32[1,1,64], index: 6, kind: input, shape index: {}]
  %s7 = inlined_call_operand.hbm [shape: bf16[1,32,32], index: 7, kind: input, shape index: {}]
  %s8 = inlined_call_operand.vmem [shape: f32[1,32], index: 8, kind: input, shape index: {}]
  %s9 = inlined_call_operand.hbm [shape: f32[2,8,32], index: 9, kind: output, shape index: {}]
  %s10 = sld [smem:[#allocation0]]
  $region101: #{tpu_custom_call.1} parent=0
    _
  %s12 = ssub.s32 1, %s10
  %s13 = scalar_select 0, %s12, %s10
  $region1: #{tpu_custom_call.1} parent=0
    #allocation3 [shape = 'u8[4096]{0}', space=vmem, size = 0x1000, scoped, tag = 'input window, operand 0']
    #allocation4 [shape = 's32[2]{0}', space=sflag, size = 0x8, scoped, tag = 'scoped memory for tpu_custom_call.1']
    #allocation5 [shape = 's32[2]{0}', space=sflag, size = 0x8, scoped, tag = 'scoped memory for tpu_custom_call.1']
    #allocation6 [shape = 'u8[4096]{0}', space=vmem, size = 0x1000, scoped, tag = 'input window, operand 1']
    #allocation7 [shape = 's32[2]{0}', space=sflag, size = 0x8, scoped, tag = 'scoped memory for tpu_custom_call.1']
    #allocation8 [shape = 'u8[2048]{0}', space=vmem, size = 0x800, scoped, tag = 'input window, operand 2, single buffered']
    #allocation9 [shape = 'u8[8192]{0}', space=vmem, size = 0x2000, scoped, tag = 'input window, operand 3, single buffered']
    #allocation10 [shape = 's32[1]{0}', space=sflag, size = 0x4, scoped, tag = 'scoped memory for tpu_custom_call.1']
    #allocation11 [shape = 'u8[8192]{0}', space=vmem, size = 0x2000, scoped, tag = 'input window, operand 5, single buffered']
    #allocation12 [shape = 'u8[8192]{0}', space=vmem, size = 0x2000, scoped, tag = 'input window, operand 7, single buffered']
    #allocation13 [shape = 's32[1]{0}', space=sflag, size = 0x4, scoped, tag = 'scoped memory for tpu_custom_call.1']
    #allocation14 [shape = 'u8[8192]{0}', space=vmem, size = 0x2000, scoped, tag = 'output window, operand 0']
    %14 = vsyncpa [#allocation4], 0
    %s15 = scalar_lea.sflag [#allocation4], 1
    %16 = vsyncpa %s15, 0
    %17 = vsyncpa [#allocation7], 0
    %s18 = scalar_lea.sflag [#allocation7], 1
    %19 = vsyncpa %s18, 0
    %20 = vsyncpa [#allocation10], 0
    %21 = vsyncpa [#allocation13], 0
    %22 = vsyncpa [#allocation5], 0
    %s23 = scalar_lea.sflag [#allocation5], 1
    %24 = vsyncpa %s23, 0
    loop: start=0, step=1, limit=4
    $region2: #{tpu_custom_call.1} parent=1 // loop_pre_header
      _
    $region3: #{tpu_custom_call.1} parent=1 // loop_header
      %s26 = sphi 0, %s30
      %p27 = scmp.ge.s32.totalorder %s26, 4
      %s33 = sphi 0, %s52
      %s34 = sphi 0, %s48
      %s35 = sphi 0, %s44
      %s36 = sphi 0, %s33
      %s37 = sphi 0, %s34
      %s38 = sphi 0, %s35
      %s39 = sphi 0, %s36
      %s40 = sphi 0, %s37
      %s41 = sphi 0, %s38
      %s57 = sphi 0, %s59
      %s60 = sphi 0, %s57
      %s61 = sphi 0, %s60
      %s77 = sphi 0, %s61
      %s83 = sphi 0, %s85
      %s86 = sphi 0, %s83
      %s87 = sphi 0, %s86
      %s103 = sphi 0, %s87
      %s109 = sphi 0, %s111
      %s112 = sphi 0, %s109
      %s113 = sphi 0, %s112
      %s129 = sphi 0, %s113
      %s135 = sphi 0, %s137
      %s138 = sphi 0, %s135
      %s139 = sphi 0, %s138
      %s155 = sphi 0, %s139
      %s161 = sphi 0, %s163
      %s164 = sphi 0, %s161
      %s165 = sphi 0, %s164
      %s181 = sphi 0, %s165
      %s187 = sphi 0, %s189
      %s190 = sphi 0, %s187
      %s191 = sphi 0, %s190
      %s207 = sphi 0, %s191
      %s213 = sphi 0, %s215
      %s216 = sphi 0, %s213
      %s217 = sphi 0, %s216
      %s233 = sphi 0, %s217
      %s239 = sphi 0, %s241
      %s242 = sphi 0, %s239
      %s243 = sphi 0, %s242
      %s259 = sphi 0, %s243
      %s263 = sphi 0, %s263
      %s265 = sphi 0, %s263
      %s266 = sphi 0, %s265
      %s280 = sphi 0, %s266
      %s288 = sphi 0, %s290
      %s291 = sphi 0, %s288
      %s292 = sphi 0, %s291
      %s308 = sphi 0, %s292
    $region4: #{tpu_custom_call.1} parent=1 // loop_header_branch
      %29 = sbr.rel (%p27) target = $region8
    $region5: #{tpu_custom_call.1} parent=1 // loop_body
      %s31 = ssub.s32 %s26, 1
      %s32 = ssub.s32 %s26, 2
      %s42 = sadd.s32 1, %s35
      %p43 = scmp.ge.s32.totalorder %s42, 1
      %s44 = scalar_select %p43, 0, %s42
      %s45 = sadd.s32 1, %s34
      %s46 = scalar_select %p43, %s45, %s34
      %p47 = scmp.ge.s32.totalorder %s46, 1
      %s48 = scalar_select %p47, 0, %s46
      %s49 = sadd.s32 1, %s33
      %s50 = scalar_select %p47, %s49, %s33
      %p51 = scmp.ge.s32.totalorder %s50, 2
      %s52 = scalar_select %p51, 0, %s50
      %s53 = ssub.s32 %s33, %s52
      %s54 = ssub.s32 %s34, %s48
      %s55 = sor.u32 %s53, %s54
      %p56 = scmp.eq.s32.totalorder %s55, 0
      %s58 = sadd.s32 %s57, 1
      %s59 = scalar_select %p56, %s57, %s58
      %p62 = pneg %p56
      %p63 = scmp.eq.s32.totalorder %s26, 1
      %p64 = por %p62, %p63
      %p65 = scmp.ne.s32.totalorder %s57, %s60
      %p66 = scmp.eq.s32.totalorder %s26, 0
      %p67 = por %p65, %p66
      %p68 = scmp.ne.s32.totalorder %s57, %s60
      %p69 = scmp.eq.s32.totalorder %s31, 1
      %p70 = por %p68, %p69
      %p71 = scmp.ne.s32.totalorder %s60, %s61
      %p72 = scmp.eq.s32.totalorder %s31, 0
      %p73 = por %p71, %p72
      %p74 = scmp.ne.s32.totalorder %s60, %s61
      %p75 = scmp.eq.s32.totalorder %s32, 1
      %p76 = por %p74, %p75
      %p78 = scmp.ne.s32.totalorder %s61, %s77
      %p79 = scmp.eq.s32.totalorder %s32, 0
      %p80 = por %p78, %p79
      %s81 = ssub.s32 %s33, %s52
      %p82 = scmp.eq.s32.totalorder %s81, 0
      %s84 = sadd.s32 %s83, 1
      %s85 = scalar_select %p82, %s83, %s84
      %p88 = pneg %p82
      %p89 = scmp.eq.s32.totalorder %s26, 1
      %p90 = por %p88, %p89
      %p91 = scmp.ne.s32.totalorder %s83, %s86
      %p92 = scmp.eq.s32.totalorder %s26, 0
      %p93 = por %p91, %p92
      %p94 = scmp.ne.s32.totalorder %s83, %s86
      %p95 = scmp.eq.s32.totalorder %s31, 1
      %p96 = por %p94, %p95
      %p97 = scmp.ne.s32.totalorder %s86, %s87
      %p98 = scmp.eq.s32.totalorder %s31, 0
      %p99 = por %p97, %p98
      %p100 = scmp.ne.s32.totalorder %s86, %s87
      %p101 = scmp.eq.s32.totalorder %s32, 1
      %p102 = por %p100, %p101
      %p104 = scmp.ne.s32.totalorder %s87, %s103
      %p105 = scmp.eq.s32.totalorder %s32, 0
      %p106 = por %p104, %p105
      %s107 = ssub.s32 %s34, %s48
      %p108 = scmp.eq.s32.totalorder %s107, 0
      %s110 = sadd.s32 %s109, 1
      %s111 = scalar_select %p108, %s109, %s110
      %p114 = pneg %p108
      %p115 = scmp.eq.s32.totalorder %s26, 1
      %p116 = por %p114, %p115
      %p117 = scmp.ne.s32.totalorder %s109, %s112
      %p118 = scmp.eq.s32.totalorder %s26, 0
      %p119 = por %p117, %p118
      %p120 = scmp.ne.s32.totalorder %s109, %s112
      %p121 = scmp.eq.s32.totalorder %s31, 1
      %p122 = por %p120, %p121
      %p123 = scmp.ne.s32.totalorder %s112, %s113
      %p124 = scmp.eq.s32.totalorder %s31, 0
      %p125 = por %p123, %p124
      %p126 = scmp.ne.s32.totalorder %s112, %s113
      %p127 = scmp.eq.s32.totalorder %s32, 1
      %p128 = por %p126, %p127
      %p130 = scmp.ne.s32.totalorder %s113, %s129
      %p131 = scmp.eq.s32.totalorder %s32, 0
      %p132 = por %p130, %p131
      %s133 = ssub.s32 %s35, %s44
      %p134 = scmp.eq.s32.totalorder %s133, 0
      %s136 = sadd.s32 %s135, 1
      %s137 = scalar_select %p134, %s135, %s136
      %p140 = pneg %p134
      %p141 = scmp.eq.s32.totalorder %s26, 1
      %p142 = por %p140, %p141
      %p143 = scmp.ne.s32.totalorder %s135, %s138
      %p144 = scmp.eq.s32.totalorder %s26, 0
      %p145 = por %p143, %p144
      %p146 = scmp.ne.s32.totalorder %s135, %s138
      %p147 = scmp.eq.s32.totalorder %s31, 1
      %p148 = por %p146, %p147
      %p149 = scmp.ne.s32.totalorder %s138, %s139
      %p150 = scmp.eq.s32.totalorder %s31, 0
      %p151 = por %p149, %p150
      %p152 = scmp.ne.s32.totalorder %s138, %s139
      %p153 = scmp.eq.s32.totalorder %s32, 1
      %p154 = por %p152, %p153
      %p156 = scmp.ne.s32.totalorder %s139, %s155
      %p157 = scmp.eq.s32.totalorder %s32, 0
      %p158 = por %p156, %p157
      %s159 = ssub.s32 %s35, %s44
      %p160 = scmp.eq.s32.totalorder %s159, 0
      %s162 = sadd.s32 %s161, 1
      %s163 = scalar_select %p160, %s161, %s162
      %p166 = pneg %p160
      %p167 = scmp.eq.s32.totalorder %s26, 1
      %p168 = por %p166, %p167
      %p169 = scmp.ne.s32.totalorder %s161, %s164
      %p170 = scmp.eq.s32.totalorder %s26, 0
      %p171 = por %p169, %p170
      %p172 = scmp.ne.s32.totalorder %s161, %s164
      %p173 = scmp.eq.s32.totalorder %s31, 1
      %p174 = por %p172, %p173
      %p175 = scmp.ne.s32.totalorder %s164, %s165
      %p176 = scmp.eq.s32.totalorder %s31, 0
      %p177 = por %p175, %p176
      %p178 = scmp.ne.s32.totalorder %s164, %s165
      %p179 = scmp.eq.s32.totalorder %s32, 1
      %p180 = por %p178, %p179
      %p182 = scmp.ne.s32.totalorder %s165, %s181
      %p183 = scmp.eq.s32.totalorder %s32, 0
      %p184 = por %p182, %p183
      %s185 = ssub.s32 %s35, %s44
      %p186 = scmp.eq.s32.totalorder %s185, 0
      %s188 = sadd.s32 %s187, 1
      %s189 = scalar_select %p186, %s187, %s188
      %p192 = pneg %p186
      %p193 = scmp.eq.s32.totalorder %s26, 1
      %p194 = por %p192, %p193
      %p195 = scmp.ne.s32.totalorder %s187, %s190
      %p196 = scmp.eq.s32.totalorder %s26, 0
      %p197 = por %p195, %p196
      %p198 = scmp.ne.s32.totalorder %s187, %s190
      %p199 = scmp.eq.s32.totalorder %s31, 1
      %p200 = por %p198, %p199
      %p201 = scmp.ne.s32.totalorder %s190, %s191
      %p202 = scmp.eq.s32.totalorder %s31, 0
      %p203 = por %p201, %p202
      %p204 = scmp.ne.s32.totalorder %s190, %s191
      %p205 = scmp.eq.s32.totalorder %s32, 1
      %p206 = por %p204, %p205
      %p208 = scmp.ne.s32.totalorder %s191, %s207
      %p209 = scmp.eq.s32.totalorder %s32, 0
      %p210 = por %p208, %p209
      %s211 = ssub.s32 %s35, %s44
      %p212 = scmp.eq.s32.totalorder %s211, 0
      %s214 = sadd.s32 %s213, 1
      %s215 = scalar_select %p212, %s213, %s214
      %p218 = pneg %p212
      %p219 = scmp.eq.s32.totalorder %s26, 1
      %p220 = por %p218, %p219
      %p221 = scmp.ne.s32.totalorder %s213, %s216
      %p222 = scmp.eq.s32.totalorder %s26, 0
      %p223 = por %p221, %p222
      %p224 = scmp.ne.s32.totalorder %s213, %s216
      %p225 = scmp.eq.s32.totalorder %s31, 1
      %p226 = por %p224, %p225
      %p227 = scmp.ne.s32.totalorder %s216, %s217
      %p228 = scmp.eq.s32.totalorder %s31, 0
      %p229 = por %p227, %p228
      %p230 = scmp.ne.s32.totalorder %s216, %s217
      %p231 = scmp.eq.s32.totalorder %s32, 1
      %p232 = por %p230, %p231
      %p234 = scmp.ne.s32.totalorder %s217, %s233
      %p235 = scmp.eq.s32.totalorder %s32, 0
      %p236 = por %p234, %p235
      %s237 = ssub.s32 %s35, %s44
      %p238 = scmp.eq.s32.totalorder %s237, 0
      %s240 = sadd.s32 %s239, 1
      %s241 = scalar_select %p238, %s239, %s240
      %p244 = pneg %p238
      %p245 = scmp.eq.s32.totalorder %s26, 1
      %p246 = por %p244, %p245
      %p247 = scmp.ne.s32.totalorder %s239, %s242
      %p248 = scmp.eq.s32.totalorder %s26, 0
      %p249 = por %p247, %p248
      %p250 = scmp.ne.s32.totalorder %s239, %s242
      %p251 = scmp.eq.s32.totalorder %s31, 1
      %p252 = por %p250, %p251
      %p253 = scmp.ne.s32.totalorder %s242, %s243
      %p254 = scmp.eq.s32.totalorder %s31, 0
      %p255 = por %p253, %p254
      %p256 = scmp.ne.s32.totalorder %s242, %s243
      %p257 = scmp.eq.s32.totalorder %s32, 1
      %p258 = por %p256, %p257
      %p260 = scmp.ne.s32.totalorder %s243, %s259
      %p261 = scmp.eq.s32.totalorder %s32, 0
      %p262 = por %p260, %p261
      %s264 = sadd.s32 %s263, 1
      %p267 = scmp.eq.s32.totalorder %s26, 1
      %p268 = scmp.ne.s32.totalorder %s263, %s265
      %p269 = scmp.eq.s32.totalorder %s26, 0
      %p270 = por %p268, %p269
      %p271 = scmp.ne.s32.totalorder %s263, %s265
      %p272 = scmp.eq.s32.totalorder %s31, 1
      %p273 = por %p271, %p272
      %p274 = scmp.ne.s32.totalorder %s265, %s266
      %p275 = scmp.eq.s32.totalorder %s31, 0
      %p276 = por %p274, %p275
      %p277 = scmp.ne.s32.totalorder %s265, %s266
      %p278 = scmp.eq.s32.totalorder %s32, 1
      %p279 = por %p277, %p278
      %p281 = scmp.ne.s32.totalorder %s266, %s280
      %p282 = scmp.eq.s32.totalorder %s32, 0
      %p283 = por %p281, %p282
      %s284 = ssub.s32 %s33, %s52
      %s285 = ssub.s32 %s34, %s48
      %s286 = sor.u32 %s284, %s285
      %p287 = scmp.eq.s32.totalorder %s286, 0
      %s289 = sadd.s32 %s288, 1
      %s290 = scalar_select %p287, %s288, %s289
      %p293 = pneg %p287
      %p294 = scmp.eq.s32.totalorder %s26, 1
      %p295 = por %p293, %p294
      %p296 = scmp.ne.s32.totalorder %s288, %s291
      %p297 = scmp.eq.s32.totalorder %s26, 0
      %p298 = por %p296, %p297
      %p299 = scmp.ne.s32.totalorder %s288, %s291
      %p300 = scmp.eq.s32.totalorder %s31, 1
      %p301 = por %p299, %p300
      %p302 = scmp.ne.s32.totalorder %s291, %s292
      %p303 = scmp.eq.s32.totalorder %s31, 0
      %p304 = por %p302, %p303
      %p305 = scmp.ne.s32.totalorder %s291, %s292
      %p306 = scmp.eq.s32.totalorder %s32, 1
      %p307 = por %p305, %p306
      %p309 = scmp.ne.s32.totalorder %s292, %s308
      %p310 = scmp.eq.s32.totalorder %s32, 0
      %p311 = por %p309, %p310
      %p312 = scmp.le.s32.totalorder 1, %s26
      %p313 = scmp.lt.s32.totalorder %s26, 3
      %p314 = pnand %p312, %p313
      %p315 = pneg %p314
      // Predicated region
      $region9: #{tpu_custom_call.1} parent=5 // pred_check
        _
      $region10: #{tpu_custom_call.1} parent=5 // pred_check_branch
        %317 = sbr.rel (%p314) target = $region12
      $region11: #{tpu_custom_call.1} parent=5 // pred_region
        %s318 = ssub.s32 %s26, 1
        // Predicated region
        $region13: #{tpu_custom_call.1} parent=11 // pred_check
          %p319 = pneg %p125
        $region14: #{tpu_custom_call.1} parent=11 // pred_check_branch
          %321 = sbr.rel (%p319) target = $region16
        $region15: #{tpu_custom_call.1} parent=11 // pred_region
          %s323 = ssub.s32 64, 64
          %324 = vsyncadd [#allocation7], %s323
          %s325 = smul.addr %s37, 64
          %s326 = scalar_lea.hbm %s2, %s325
          %s328 = sshll.u32 [#allocation8], 4
          %s329 = int_to_ptr.vmem [resolvable:$true] %s328
          %331 = dma.hbm_to_vmem [thread:$0]  %s326, 64, %s329, [#allocation7]
        $region16: #{tpu_custom_call.1} parent=11 // pred_fallthru
          _
        // Predicated region
        $region17: #{tpu_custom_call.1} parent=11 // pred_check
          %p332 = pneg %p151
        $region18: #{tpu_custom_call.1} parent=11 // pred_check_branch
          %334 = sbr.rel (%p332) target = $region20
        $region19: #{tpu_custom_call.1} parent=11 // pred_region
          %s336 = ssub.s32 256, 256
          %337 = vsyncadd [#allocation10], %s336
          %s338 = smul.addr %s38, 4
          %s339 = smul.addr %s338, 64
          %s340 = scalar_lea.hbm %s3, %s339
          %s341 = sshll.u32 [#allocation9], 4
          %s342 = int_to_ptr.vmem [resolvable:$true] %s341
          %347 = dma.hbm_to_vmem [thread:$0]  %s340, 256, %s342, [#allocation10], 64, 64, 4
        $region20: #{tpu_custom_call.1} parent=11 // pred_fallthru
          _
        // Predicated region
        $region21: #{tpu_custom_call.1} parent=11 // pred_check
          %p348 = pneg %p177
        $region22: #{tpu_custom_call.1} parent=11 // pred_check_branch
          %350 = sbr.rel (%p348) target = $region24
        $region23: #{tpu_custom_call.1} parent=11 // pred_region
          %p351 = scmp.lt.s32.totalorder %s38, 0
          %s352 = scalar_select %p351, %s38, 0
          %s353 = scalar_lea.vmem %s4, %s352
        $region24: #{tpu_custom_call.1} parent=11 // pred_fallthru
          _
        // Predicated region
        $region25: #{tpu_custom_call.1} parent=11 // pred_check
          %p354 = pneg %p203
        $region26: #{tpu_custom_call.1} parent=11 // pred_check_branch
          %356 = sbr.rel (%p354) target = $region28
        $region27: #{tpu_custom_call.1} parent=11 // pred_region
          %s358 = ssub.s32 256, 256
          %359 = vsyncadd [#allocation10], %s358
          %s360 = smul.addr %s38, 4
          %s361 = smul.addr %s360, 64
          %s362 = scalar_lea.hbm %s5, %s361
          %s363 = sshll.u32 [#allocation11], 4
          %s364 = int_to_ptr.vmem [resolvable:$true] %s363
          %369 = dma.hbm_to_vmem [thread:$0]  %s362, 256, %s364, [#allocation10], 64, 64, 4
        $region28: #{tpu_custom_call.1} parent=11 // pred_fallthru
          _
        // Predicated region
        $region29: #{tpu_custom_call.1} parent=11 // pred_check
          %p370 = pneg %p229
        $region30: #{tpu_custom_call.1} parent=11 // pred_check_branch
          %372 = sbr.rel (%p370) target = $region32
        $region31: #{tpu_custom_call.1} parent=11 // pred_region
          %p373 = scmp.lt.s32.totalorder %s38, 0
          %s374 = scalar_select %p373, %s38, 0
          %s375 = scalar_lea.vmem %s6, %s374
        $region32: #{tpu_custom_call.1} parent=11 // pred_fallthru
          _
        // Predicated region
        $region33: #{tpu_custom_call.1} parent=11 // pred_check
          %p376 = pneg %p255
        $region34: #{tpu_custom_call.1} parent=11 // pred_check_branch
          %378 = sbr.rel (%p376) target = $region36
        $region35: #{tpu_custom_call.1} parent=11 // pred_region
          %s380 = ssub.s32 256, 256
          %381 = vsyncadd [#allocation13], %s380
          %s382 = smul.addr %s38, 4
          %s383 = smul.addr %s382, 64
          %s384 = scalar_lea.hbm %s7, %s383
          %s385 = sshll.u32 [#allocation12], 4
          %s386 = int_to_ptr.vmem [resolvable:$true] %s385
          %391 = dma.hbm_to_vmem [thread:$0]  %s384, 256, %s386, [#allocation13], 64, 64, 4
        $region36: #{tpu_custom_call.1} parent=11 // pred_fallthru
          _
        // Predicated region
        $region37: #{tpu_custom_call.1} parent=11 // pred_check
          %p392 = pneg %p276
        $region38: #{tpu_custom_call.1} parent=11 // pred_check_branch
          %394 = sbr.rel (%p392) target = $region40
        $region39: #{tpu_custom_call.1} parent=11 // pred_region
          _
        $region40: #{tpu_custom_call.1} parent=11 // pred_fallthru
          _
      $region12: #{tpu_custom_call.1} parent=5 // pred_fallthru
        _
      %p395 = scmp.lt.s32.totalorder %s26, 2
      // Predicated region
      $region41: #{tpu_custom_call.1} parent=5 // pred_check
        %p396 = pneg %p395
      $region42: #{tpu_custom_call.1} parent=5 // pred_check_branch
        %398 = sbr.rel (%p396) target = $region44
      $region43: #{tpu_custom_call.1} parent=5 // pred_region
        // Predicated region
        $region45: #{tpu_custom_call.1} parent=43 // pred_check
          %p399 = pneg %p67
        $region46: #{tpu_custom_call.1} parent=43 // pred_check_branch
          %401 = sbr.rel (%p399) target = $region48
        $region47: #{tpu_custom_call.1} parent=43 // pred_region
          %s402 = sand.u32 %s57, 1
          %s403 = scalar_lea.sflag [#allocation4], %s402
          %s404 = sand.u32 %s57, 1
          %s405 = smul.addr %s404, 4
          %s406 = scalar_lea.vmem [#allocation3], %s405
          %s408 = ssub.s32 64, 64
          %409 = vsyncadd %s403, %s408
          %s410 = sadd.s32 %s34, %s33
          %s411 = smul.addr %s410, 64
          %s412 = scalar_lea.hbm %s0, %s411
          %s414 = sshll.u32 %s406, 4
          %s415 = int_to_ptr.vmem [resolvable:$true] %s414
          %417 = dma.hbm_to_vmem [thread:$0]  %s412, 64, %s415, %s403
        $region48: #{tpu_custom_call.1} parent=43 // pred_fallthru
          _
        // Predicated region
        $region49: #{tpu_custom_call.1} parent=43 // pred_check
          %p418 = pneg %p93
        $region50: #{tpu_custom_call.1} parent=43 // pred_check_branch
          %420 = sbr.rel (%p418) target = $region52
        $region51: #{tpu_custom_call.1} parent=43 // pred_region
          %s421 = sand.u32 %s26, 1
          %s422 = scalar_lea.sflag [#allocation7], %s421
          %s423 = sand.u32 %s83, 1
          %s424 = smul.addr %s423, 4
          %s425 = scalar_lea.vmem [#allocation6], %s424
          %s427 = ssub.s32 64, 64
          %428 = vsyncadd %s422, %s427
          %s429 = smul.addr %s33, 64
          %s430 = scalar_lea.hbm %s1, %s429
          %s432 = sshll.u32 %s425, 4
          %s433 = int_to_ptr.vmem [resolvable:$true] %s432
          %435 = dma.hbm_to_vmem [thread:$0]  %s430, 64, %s433, %s422
        $region52: #{tpu_custom_call.1} parent=43 // pred_fallthru
          _
      $region44: #{tpu_custom_call.1} parent=5 // pred_fallthru
        _
      %p436 = scmp.le.s32.totalorder 1, %s26
      %p437 = scmp.lt.s32.totalorder %s26, 3
      %p438 = pnand %p436, %p437
      %p439 = pneg %p438
      // Predicated region
      $region53: #{tpu_custom_call.1} parent=5 // pred_check
        _
      $region54: #{tpu_custom_call.1} parent=5 // pred_check_branch
        %441 = sbr.rel (%p438) target = $region56
      $region55: #{tpu_custom_call.1} parent=5 // pred_region
        %s442 = ssub.s32 %s26, 1
        %s443 = sand.u32 %s60, 1
        %s444 = scalar_lea.sflag [#allocation4], %s443
        %s445 = sand.u32 %s60, 1
        %s446 = smul.addr %s445, 4
        %s447 = scalar_lea.vmem [#allocation3], %s446
        // Predicated region
        $region57: #{tpu_custom_call.1} parent=55 // pred_check
          %p448 = pneg %p73
        $region58: #{tpu_custom_call.1} parent=55 // pred_check_branch
          %450 = sbr.rel (%p448) target = $region60
        $region59: #{tpu_custom_call.1} parent=55 // pred_region
          %451 = dma.done %s444, 64
        $region60: #{tpu_custom_call.1} parent=55 // pred_fallthru
          _
        %s452 = sand.u32 %s31, 1
        %s453 = scalar_lea.sflag [#allocation7], %s452
        %s454 = sand.u32 %s86, 1
        %s455 = smul.addr %s454, 4
        %s456 = scalar_lea.vmem [#allocation6], %s455
        // Predicated region
        $region61: #{tpu_custom_call.1} parent=55 // pred_check
          %p457 = pneg %p99
        $region62: #{tpu_custom_call.1} parent=55 // pred_check_branch
          %459 = sbr.rel (%p457) target = $region64
        $region63: #{tpu_custom_call.1} parent=55 // pred_region
          %460 = dma.done %s453, 64
        $region64: #{tpu_custom_call.1} parent=55 // pred_fallthru
          _
        // Predicated region
        $region65: #{tpu_custom_call.1} parent=55 // pred_check
          %p461 = pneg %p125
        $region66: #{tpu_custom_call.1} parent=55 // pred_check_branch
          %463 = sbr.rel (%p461) target = $region68
        $region67: #{tpu_custom_call.1} parent=55 // pred_region
          %464 = dma.done [#allocation7], 64
        $region68: #{tpu_custom_call.1} parent=55 // pred_fallthru
          _
        // Predicated region
        $region69: #{tpu_custom_call.1} parent=55 // pred_check
          %p465 = pneg %p151
        $region70: #{tpu_custom_call.1} parent=55 // pred_check_branch
          %467 = sbr.rel (%p465) target = $region72
        $region71: #{tpu_custom_call.1} parent=55 // pred_region
          %468 = dma.done [#allocation10], 256
        $region72: #{tpu_custom_call.1} parent=55 // pred_fallthru
          _
        // Predicated region
        $region73: #{tpu_custom_call.1} parent=55 // pred_check
          %p469 = pneg %p203
        $region74: #{tpu_custom_call.1} parent=55 // pred_check_branch
          %471 = sbr.rel (%p469) target = $region76
        $region75: #{tpu_custom_call.1} parent=55 // pred_region
          %472 = dma.done [#allocation10], 256
        $region76: #{tpu_custom_call.1} parent=55 // pred_fallthru
          _
        // Predicated region
        $region77: #{tpu_custom_call.1} parent=55 // pred_check
          %p473 = pneg %p255
        $region78: #{tpu_custom_call.1} parent=55 // pred_check_branch
          %475 = sbr.rel (%p473) target = $region80
        $region79: #{tpu_custom_call.1} parent=55 // pred_region
          %476 = dma.done [#allocation13], 256
        $region80: #{tpu_custom_call.1} parent=55 // pred_fallthru
          _
        %s477 = sand.u32 %s60, 1
        %s478 = scalar_lea.sflag [#allocation4], %s477
        %s479 = sand.u32 %s60, 1
        %s480 = smul.addr %s479, 4
        %s481 = scalar_lea.vmem [#allocation3], %s480
        %p482 = pneg %p73
        %p483 = pneg %p70
        %s484 = sand.u32 %s31, 1
        %s485 = scalar_lea.sflag [#allocation7], %s484
        %s486 = sand.u32 %s86, 1
        %s487 = smul.addr %s486, 4
        %s488 = scalar_lea.vmem [#allocation6], %s487
        %p489 = pneg %p99
        %p490 = pneg %p96
        %p491 = pneg %p125
        %p492 = pneg %p122
        %p493 = pneg %p151
        %p494 = pneg %p148
        %p495 = scmp.lt.s32.totalorder %s38, 0
        %s496 = scalar_select %p495, %s38, 0
        %s497 = scalar_lea.vmem %s4, %s496
        %p498 = pneg %p177
        %p499 = pneg %p174
        %p500 = pneg %p203
        %p501 = pneg %p200
        %p502 = scmp.lt.s32.totalorder %s38, 0
        %s503 = scalar_select %p502, %s38, 0
        %s504 = scalar_lea.vmem %s6, %s503
        %p505 = pneg %p229
        %p506 = pneg %p226
        %p507 = pneg %p255
        %p508 = pneg %p252
        %p509 = pneg %p276
        %p510 = pneg %p273
        %p511 = pneg %p304
        %p512 = pneg %p301
        %s513 = sand.u32 %s291, 1
        %s514 = scalar_lea.sflag [#allocation5], %s513
        %s515 = sand.u32 %s291, 1
        %s516 = smul.addr %s515, 8
        %s517 = scalar_lea.vmem [#allocation14], %s516
        %p518 = scmp.lt.s32.totalorder %s38, 0
        %s519 = scalar_select %p518, %s38, 0
        %s520 = scalar_lea.vmem %s4, %s519
        %p521 = scmp.lt.s32.totalorder %s38, 0
        %s522 = scalar_select %p521, %s38, 0
        %s523 = scalar_lea.vmem %s6, %s522
        %p525 = scmp.eq.s32.totalorder %s38, 0
        // Predicated region
        $region81: #{tpu_custom_call.1} parent=55 // pred_check
          %p526 = pneg %p525
        $region82: #{tpu_custom_call.1} parent=55 // pred_check_branch
          %528 = sbr.rel (%p526) target = $region84
        $region83: #{tpu_custom_call.1} parent=55 // pred_region
          %vm529 = vcmask 261120
          %530 = vst.msk [vmem:[#allocation2] sm:$0xff] %vm529, 0.0
        $region84: #{tpu_custom_call.1} parent=55 // pred_fallthru
          _
        %v531 = vld [vmem:[%s447] sm:$0xf]
        %v532 = vld [vmem:[%s456] sm:$0xf]
        %v533 = vld [vmem:[#allocation9] sm:$0xf]
        %v534 = vld [vmem:[#allocation9 + $0x4] sm:$0xf]
        %v535 = vld [vmem:[#allocation9 + $0x8] sm:$0xf]
        %v536 = vld [vmem:[#allocation9 + $0xc] sm:$0xf]
        %v537 = vld [vmem:[%s520] sm:$0x1]
        %v539 = vlaneseq
        %v540 = vshrl.u32 %v539, 7
        %v541 = vsub.s32 0, %v540
        %v542 = vrot.slane %v537, %v541
        %v548 = vunpack.c.l.b16 %v533
        %v549 = vunpack.c.l.b16 %v534
        %v550 = vunpack.c.l.b16 %v535
        %v551 = vunpack.c.l.b16 %v536
        %v552 = vpack.c.b16 %v549, %v548
        %v553 = vpack.c.b16 %v551, %v550
        %vm556 = vcmask 261120
        %v558 = vsel %vm556, %v531, 0
        %560 = vmatprep.subr.bf16.mxu0 0
        %561 = vmatpush1.bf16.msra.mxu0 0
        %562 = vmatprep.subr.bf16.mxu0 0
        %563 = vmatpush1.bf16.msra.mxu0 0
        %564 = vmatprep.subr.bf16.mxu0 0
        %565 = vmatpush1.bf16.msra.mxu0 0
        %566 = vmatprep.subr.bf16.mxu0 0
        %567 = vmatpush1.bf16.msra.mxu0 0
        %568 = vmatprep.subr.bf16.mxu0 0
        %569 = vmatpush1.bf16.msra.mxu0 0
        %570 = vmatprep.subr.bf16.mxu0 0
        %571 = vmatpush1.bf16.msra.mxu0 0
        %572 = vmatprep.subr.bf16.mxu0 0
        %573 = vmatpush1.bf16.msra.mxu0 %v553
        %574 = vmatprep.subr.bf16.mxu0 0
        %575 = vmatpush1.bf16.msra.mxu0 %v552
        %576 = vmatprep.subr.bf16.mxu0 0
        %577 = vmatpush2.bf16.msra.mxu0 0
        %578 = vmatprep.subr.bf16.mxu0 0
        %579 = vmatpush2.bf16.msra.mxu0 0
        %580 = vmatprep.subr.bf16.mxu0 0
        %581 = vmatpush2.bf16.msra.mxu0 0
        %582 = vmatprep.subr.bf16.mxu0 0
        %583 = vmatpush2.bf16.msra.mxu0 0
        %584 = vmatprep.subr.bf16.mxu0 0
        %585 = vmatpush2.bf16.msra.mxu0 0
        %586 = vmatprep.subr.bf16.mxu0 0
        %587 = vmatpush2.bf16.msra.mxu0 0
        %588 = vmatprep.subr.bf16.mxu0 0
        %589 = vmatpush2.bf16.msra.mxu0 0
        %590 = vmatprep.subr.bf16.mxu0 0
        %591 = vmatpush2.bf16.msra.mxu0 0
        %592 = vmatprep.mubr.bf16.mxu0 0
        %593 = vmatmul.mubr.bf16.gmra.mxu0 %v558
        %v594 = vpop.f32.mrf.mxu0
        %v595 = vadd.f32 %v542, %v594
        %v596 = vpop.f32.mrf.mxu0
        %v597 = vpop.f32.mrf.mxu0
        %v598 = vpop.f32.mrf.mxu0
        %599 = vdwg.mxu0
        %v600 = vpack.c.bf16 %v595, %v595
        %v601 = vld [vmem:[#allocation11] sm:$0xf]
        %v602 = vld [vmem:[#allocation11 + $0x4] sm:$0xf]
        %v603 = vld [vmem:[#allocation11 + $0x8] sm:$0xf]
        %v604 = vld [vmem:[#allocation11 + $0xc] sm:$0xf]
        %v605 = vld [vmem:[%s523] sm:$0x1]
        %v607 = vlaneseq
        %v608 = vshrl.u32 %v607, 7
        %v609 = vsub.s32 0, %v608
        %v610 = vrot.slane %v605, %v609
        %v616 = vunpack.c.l.b16 %v601
        %v617 = vunpack.c.l.b16 %v602
        %v618 = vunpack.c.l.b16 %v603
        %v619 = vunpack.c.l.b16 %v604
        %v620 = vpack.c.b16 %v617, %v616
        %v621 = vpack.c.b16 %v619, %v618
        %v625 = vsel %vm556, %v532, 0
        %627 = vmatprep.subr.bf16.mxu0 0
        %628 = vmatpush1.bf16.msra.mxu0 0
        %629 = vmatprep.subr.bf16.mxu0 0
        %630 = vmatpush1.bf16.msra.mxu0 0
        %631 = vmatprep.subr.bf16.mxu0 0
        %632 = vmatpush1.bf16.msra.mxu0 0
        %633 = vmatprep.subr.bf16.mxu0 0
        %634 = vmatpush1.bf16.msra.mxu0 0
        %635 = vmatprep.subr.bf16.mxu0 0
        %636 = vmatpush1.bf16.msra.mxu0 0
        %637 = vmatprep.subr.bf16.mxu0 0
        %638 = vmatpush1.bf16.msra.mxu0 0
        %639 = vmatprep.subr.bf16.mxu0 0
        %640 = vmatpush1.bf16.msra.mxu0 %v621
        %641 = vmatprep.subr.bf16.mxu0 0
        %642 = vmatpush1.bf16.msra.mxu0 %v620
        %643 = vmatprep.subr.bf16.mxu0 0
        %644 = vmatpush2.bf16.msra.mxu0 0
        %645 = vmatprep.subr.bf16.mxu0 0
        %646 = vmatpush2.bf16.msra.mxu0 0
        %647 = vmatprep.subr.bf16.mxu0 0
        %648 = vmatpush2.bf16.msra.mxu0 0
        %649 = vmatprep.subr.bf16.mxu0 0
        %650 = vmatpush2.bf16.msra.mxu0 0
        %651 = vmatprep.subr.bf16.mxu0 0
        %652 = vmatpush2.bf16.msra.mxu0 0
        %653 = vmatprep.subr.bf16.mxu0 0
        %654 = vmatpush2.bf16.msra.mxu0 0
        %655 = vmatprep.subr.bf16.mxu0 0
        %656 = vmatpush2.bf16.msra.mxu0 0
        %657 = vmatprep.subr.bf16.mxu0 0
        %658 = vmatpush2.bf16.msra.mxu0 0
        %659 = vmatprep.mubr.bf16.mxu0 0
        %660 = vmatmul.mubr.bf16.gmra.mxu0 %v625
        %v661 = vpop.f32.mrf.mxu0
        %v662 = vadd.f32 %v610, %v661
        %v663 = vpop.f32.mrf.mxu0
        %v664 = vpop.f32.mrf.mxu0
        %v665 = vpop.f32.mrf.mxu0
        %666 = vdwg.mxu0
        %v667 = vpack.c.bf16 %v662, %v662
        %v668 = vld [vmem:[#allocation8] sm:$0xf]
        %v669 = vunpack.c.l.bf16 %v668
        %vm670 = vcmask 64512
        %v672 = vsel %vm670, %v600, 0
        %v675 = vsel %vm670, %v667, 0
        %677 = vmatprep.subr.bf16.mxu0 0
        %678 = vmatpush1.bf16.xpose.msra.mxu0 0
        %679 = vmatprep.subr.bf16.mxu0 0
        %680 = vmatpush1.bf16.xpose.msra.mxu0 0
        %681 = vmatprep.subr.bf16.mxu0 0
        %682 = vmatpush1.bf16.xpose.msra.mxu0 0
        %683 = vmatprep.subr.bf16.mxu0 0
        %684 = vmatpush1.bf16.xpose.msra.mxu0 0
        %685 = vmatprep.subr.bf16.mxu0 0
        %686 = vmatpush1.bf16.xpose.msra.mxu0 0
        %687 = vmatprep.subr.bf16.mxu0 0
        %688 = vmatpush1.bf16.xpose.msra.mxu0 0
        %689 = vmatprep.subr.bf16.mxu0 0
        %690 = vmatpush1.bf16.xpose.msra.mxu0 0
        %691 = vmatprep.subr.bf16.mxu0 0
        %692 = vmatpush1.bf16.xpose.msra.mxu0 %v675
        %693 = vmatprep.subr.bf16.mxu0 0
        %694 = vmatpush2.bf16.xpose.msra.mxu0 0
        %695 = vmatprep.subr.bf16.mxu0 0
        %696 = vmatpush2.bf16.xpose.msra.mxu0 0
        %697 = vmatprep.subr.bf16.mxu0 0
        %698 = vmatpush2.bf16.xpose.msra.mxu0 0
        %699 = vmatprep.subr.bf16.mxu0 0
        %700 = vmatpush2.bf16.xpose.msra.mxu0 0
        %701 = vmatprep.subr.bf16.mxu0 0
        %702 = vmatpush2.bf16.xpose.msra.mxu0 0
        %703 = vmatprep.subr.bf16.mxu0 0
        %704 = vmatpush2.bf16.xpose.msra.mxu0 0
        %705 = vmatprep.subr.bf16.mxu0 0
        %706 = vmatpush2.bf16.xpose.msra.mxu0 0
        %707 = vmatprep.subr.bf16.mxu0 0
        %708 = vmatpush2.bf16.xpose.msra.mxu0 0
        %709 = vmatprep.mubr.bf16.mxu0 0
        %710 = vmatmul.mubr.bf16.gmra.mxu0 %v672
        %v711 = vpop.f32.mrf.mxu0
        %v712 = vadd.f32 %v669, %v711
        %v713 = vpop.f32.mrf.mxu0
        %v714 = vpop.f32.mrf.mxu0
        %v715 = vpop.f32.mrf.mxu0
        %716 = vdwg.mxu0
        %v717 = vsel %vm670, %v712, -inf
        %718 = vmax.xlane.f32.xlu0 %v717
        %v719 = vpop.xlane.xlu0 %718
        %v720 = vsub.f32 %v712, %v719
        %v721 = vmul.f32 %v720, 1.442695
        %v722 = vpow.pop %v721
        %v723 = vsel %vm670, %v722, 0.0
        %724 = vadd.xlane.f32.xlu0 %v723
        %v725 = vpop.xlane.xlu0 %724
        %v726 = vpack.c.bf16 %v722, %v722
        %728 = vrot.lane.b32.xlu0 %v667, 96
        %v729 = vpop.permute.xlu0 %728
        %v731 = vsel %vm670, %v726, 0
        %vm733 = vcmask 1043456
        %v735 = vsel %vm733, %v729, 0
        %737 = vmatprep.subr.bf16.mxu0 0
        %738 = vmatpush1.bf16.msra.mxu0 0
        %739 = vmatprep.subr.bf16.mxu0 0
        %740 = vmatpush1.bf16.msra.mxu0 0
        %741 = vmatprep.subr.bf16.mxu0 0
        %742 = vmatpush1.bf16.msra.mxu0 0
        %743 = vmatprep.subr.bf16.mxu0 0
        %744 = vmatpush1.bf16.msra.mxu0 0
        %745 = vmatprep.subr.bf16.mxu0 0
        %746 = vmatpush1.bf16.msra.mxu0 0
        %747 = vmatprep.subr.bf16.mxu0 0
        %748 = vmatpush1.bf16.msra.mxu0 0
        %749 = vmatprep.subr.bf16.mxu0 0
        %750 = vmatpush1.bf16.msra.mxu0 0
        %751 = vmatprep.subr.bf16.mxu0 0
        %752 = vmatpush1.bf16.msra.mxu0 %v735
        %753 = vmatprep.subr.bf16.mxu0 0
        %754 = vmatpush2.bf16.msra.mxu0 0
        %755 = vmatprep.subr.bf16.mxu0 0
        %756 = vmatpush2.bf16.msra.mxu0 0
        %757 = vmatprep.subr.bf16.mxu0 0
        %758 = vmatpush2.bf16.msra.mxu0 0
        %759 = vmatprep.subr.bf16.mxu0 0
        %760 = vmatpush2.bf16.msra.mxu0 0
        %761 = vmatprep.subr.bf16.mxu0 0
        %762 = vmatpush2.bf16.msra.mxu0 0
        %763 = vmatprep.subr.bf16.mxu0 0
        %764 = vmatpush2.bf16.msra.mxu0 0
        %765 = vmatprep.subr.bf16.mxu0 0
        %766 = vmatpush2.bf16.msra.mxu0 0
        %767 = vmatprep.subr.bf16.mxu0 0
        %768 = vmatpush2.bf16.msra.mxu0 0
        %769 = vmatprep.mubr.bf16.mxu0 0
        %770 = vmatmul.mubr.bf16.gmra.mxu0 %v731
        %v771 = vpop.f32.mrf.mxu0
        %v772 = vadd.f32 0.0, %v771
        %v773 = vpop.f32.mrf.mxu0
        %v774 = vpop.f32.mrf.mxu0
        %v775 = vpop.f32.mrf.mxu0
        %776 = vdwg.mxu0
        %v777 = vrcp.pop %v725
        %v778 = vmul.f32 %v772, %v777
        %780 = vrot.lane.b32.xlu0 %v600, 120
        %v781 = vpop.permute.xlu0 %780
        %782 = vrot.lane.b32.xlu0 %v667, 120
        %v783 = vpop.permute.xlu0 %782
        %v785 = vsel %vm670, %v781, 0
        %v788 = vsel %vm670, %v783, 0
        %790 = vmatprep.subr.bf16.mxu0 0
        %791 = vmatpush1.bf16.xpose.msra.mxu0 0
        %792 = vmatprep.subr.bf16.mxu0 0
        %793 = vmatpush1.bf16.xpose.msra.mxu0 0
        %794 = vmatprep.subr.bf16.mxu0 0
        %795 = vmatpush1.bf16.xpose.msra.mxu0 0
        %796 = vmatprep.subr.bf16.mxu0 0
        %797 = vmatpush1.bf16.xpose.msra.mxu0 0
        %798 = vmatprep.subr.bf16.mxu0 0
        %799 = vmatpush1.bf16.xpose.msra.mxu0 0
        %800 = vmatprep.subr.bf16.mxu0 0
        %801 = vmatpush1.bf16.xpose.msra.mxu0 0
        %802 = vmatprep.subr.bf16.mxu0 0
        %803 = vmatpush1.bf16.xpose.msra.mxu0 0
        %804 = vmatprep.subr.bf16.mxu0 0
        %805 = vmatpush1.bf16.xpose.msra.mxu0 %v788
        %806 = vmatprep.subr.bf16.mxu0 0
        %807 = vmatpush2.bf16.xpose.msra.mxu0 0
        %808 = vmatprep.subr.bf16.mxu0 0
        %809 = vmatpush2.bf16.xpose.msra.mxu0 0
        %810 = vmatprep.subr.bf16.mxu0 0
        %811 = vmatpush2.bf16.xpose.msra.mxu0 0
        %812 = vmatprep.subr.bf16.mxu0 0
        %813 = vmatpush2.bf16.xpose.msra.mxu0 0
        %814 = vmatprep.subr.bf16.mxu0 0
        %815 = vmatpush2.bf16.xpose.msra.mxu0 0
        %816 = vmatprep.subr.bf16.mxu0 0
        %817 = vmatpush2.bf16.xpose.msra.mxu0 0
        %818 = vmatprep.subr.bf16.mxu0 0
        %819 = vmatpush2.bf16.xpose.msra.mxu0 0
        %820 = vmatprep.subr.bf16.mxu0 0
        %821 = vmatpush2.bf16.xpose.msra.mxu0 0
        %822 = vmatprep.mubr.bf16.mxu0 0
        %823 = vmatmul.mubr.bf16.gmra.mxu0 %v785
        %v824 = vpop.f32.mrf.mxu0
        %v825 = vadd.f32 %v669, %v824
        %v826 = vpop.f32.mrf.mxu0
        %v827 = vpop.f32.mrf.mxu0
        %v828 = vpop.f32.mrf.mxu0
        %829 = vdwg.mxu0
        %v830 = vsel %vm670, %v825, -inf
        %831 = vmax.xlane.f32.xlu0 %v830
        %v832 = vpop.xlane.xlu0 %831
        %v833 = vsub.f32 %v825, %v832
        %v834 = vmul.f32 %v833, 1.442695
        %v835 = vpow.pop %v834
        %v836 = vsel %vm670, %v835, 0.0
        %837 = vadd.xlane.f32.xlu0 %v836
        %v838 = vpop.xlane.xlu0 %837
        %v839 = vpack.c.bf16 %v835, %v835
        %840 = vrot.lane.b32.xlu0 %v667, 88
        %v841 = vpop.permute.xlu0 %840
        %v843 = vsel %vm670, %v839, 0
        %v846 = vsel %vm733, %v841, 0
        %848 = vmatprep.subr.bf16.mxu0 0
        %849 = vmatpush1.bf16.msra.mxu0 0
        %850 = vmatprep.subr.bf16.mxu0 0
        %851 = vmatpush1.bf16.msra.mxu0 0
        %852 = vmatprep.subr.bf16.mxu0 0
        %853 = vmatpush1.bf16.msra.mxu0 0
        %854 = vmatprep.subr.bf16.mxu0 0
        %855 = vmatpush1.bf16.msra.mxu0 0
        %856 = vmatprep.subr.bf16.mxu0 0
        %857 = vmatpush1.bf16.msra.mxu0 0
        %858 = vmatprep.subr.bf16.mxu0 0
        %859 = vmatpush1.bf16.msra.mxu0 0
        %860 = vmatprep.subr.bf16.mxu0 0
        %861 = vmatpush1.bf16.msra.mxu0 0
        %862 = vmatprep.subr.bf16.mxu0 0
        %863 = vmatpush1.bf16.msra.mxu0 %v846
        %864 = vmatprep.subr.bf16.mxu0 0
        %865 = vmatpush2.bf16.msra.mxu0 0
        %866 = vmatprep.subr.bf16.mxu0 0
        %867 = vmatpush2.bf16.msra.mxu0 0
        %868 = vmatprep.subr.bf16.mxu0 0
        %869 = vmatpush2.bf16.msra.mxu0 0
        %870 = vmatprep.subr.bf16.mxu0 0
        %871 = vmatpush2.bf16.msra.mxu0 0
        %872 = vmatprep.subr.bf16.mxu0 0
        %873 = vmatpush2.bf16.msra.mxu0 0
        %874 = vmatprep.subr.bf16.mxu0 0
        %875 = vmatpush2.bf16.msra.mxu0 0
        %876 = vmatprep.subr.bf16.mxu0 0
        %877 = vmatpush2.bf16.msra.mxu0 0
        %878 = vmatprep.subr.bf16.mxu0 0
        %879 = vmatpush2.bf16.msra.mxu0 0
        %880 = vmatprep.mubr.bf16.mxu0 0
        %881 = vmatmul.mubr.bf16.gmra.mxu0 %v843
        %v882 = vpop.f32.mrf.mxu0
        %v883 = vadd.f32 0.0, %v882
        %v884 = vpop.f32.mrf.mxu0
        %v885 = vpop.f32.mrf.mxu0
        %v886 = vpop.f32.mrf.mxu0
        %887 = vdwg.mxu0
        %v888 = vrcp.pop %v838
        %v889 = vmul.f32 %v883, %v888
        %890 = vrot.lane.b32.xlu0 %v600, 112
        %v891 = vpop.permute.xlu0 %890
        %892 = vrot.lane.b32.xlu0 %v667, 112
        %v893 = vpop.permute.xlu0 %892
        %v895 = vsel %vm670, %v891, 0
        %v898 = vsel %vm670, %v893, 0
        %900 = vmatprep.subr.bf16.mxu0 0
        %901 = vmatpush1.bf16.xpose.msra.mxu0 0
        %902 = vmatprep.subr.bf16.mxu0 0
        %903 = vmatpush1.bf16.xpose.msra.mxu0 0
        %904 = vmatprep.subr.bf16.mxu0 0
        %905 = vmatpush1.bf16.xpose.msra.mxu0 0
        %906 = vmatprep.subr.bf16.mxu0 0
        %907 = vmatpush1.bf16.xpose.msra.mxu0 0
        %908 = vmatprep.subr.bf16.mxu0 0
        %909 = vmatpush1.bf16.xpose.msra.mxu0 0
        %910 = vmatprep.subr.bf16.mxu0 0
        %911 = vmatpush1.bf16.xpose.msra.mxu0 0
        %912 = vmatprep.subr.bf16.mxu0 0
        %913 = vmatpush1.bf16.xpose.msra.mxu0 0
        %914 = vmatprep.subr.bf16.mxu0 0
        %915 = vmatpush1.bf16.xpose.msra.mxu0 %v898
        %916 = vmatprep.subr.bf16.mxu0 0
        %917 = vmatpush2.bf16.xpose.msra.mxu0 0
        %918 = vmatprep.subr.bf16.mxu0 0
        %919 = vmatpush2.bf16.xpose.msra.mxu0 0
        %920 = vmatprep.subr.bf16.mxu0 0
        %921 = vmatpush2.bf16.xpose.msra.mxu0 0
        %922 = vmatprep.subr.bf16.mxu0 0
        %923 = vmatpush2.bf16.xpose.msra.mxu0 0
        %924 = vmatprep.subr.bf16.mxu0 0
        %925 = vmatpush2.bf16.xpose.msra.mxu0 0
        %926 = vmatprep.subr.bf16.mxu0 0
        %927 = vmatpush2.bf16.xpose.msra.mxu0 0
        %928 = vmatprep.subr.bf16.mxu0 0
        %929 = vmatpush2.bf16.xpose.msra.mxu0 0
        %930 = vmatprep.subr.bf16.mxu0 0
        %931 = vmatpush2.bf16.xpose.msra.mxu0 0
        %932 = vmatprep.mubr.bf16.mxu0 0
        %933 = vmatmul.mubr.bf16.gmra.mxu0 %v895
        %v934 = vpop.f32.mrf.mxu0
        %v935 = vadd.f32 %v669, %v934
        %v936 = vpop.f32.mrf.mxu0
        %v937 = vpop.f32.mrf.mxu0
        %v938 = vpop.f32.mrf.mxu0
        %939 = vdwg.mxu0
        %v940 = vsel %vm670, %v935, -inf
        %941 = vmax.xlane.f32.xlu0 %v940
        %v942 = vpop.xlane.xlu0 %941
        %v943 = vsub.f32 %v935, %v942
        %v944 = vmul.f32 %v943, 1.442695
        %v945 = vpow.pop %v944
        %v946 = vsel %vm670, %v945, 0.0
        %947 = vadd.xlane.f32.xlu0 %v946
        %v948 = vpop.xlane.xlu0 %947
        %v949 = vpack.c.bf16 %v945, %v945
        %950 = vrot.lane.b32.xlu0 %v667, 80
        %v951 = vpop.permute.xlu0 %950
        %v953 = vsel %vm670, %v949, 0
        %v956 = vsel %vm733, %v951, 0
        %958 = vmatprep.subr.bf16.mxu0 0
        %959 = vmatpush1.bf16.msra.mxu0 0
        %960 = vmatprep.subr.bf16.mxu0 0
        %961 = vmatpush1.bf16.msra.mxu0 0
        %962 = vmatprep.subr.bf16.mxu0 0
        %963 = vmatpush1.bf16.msra.mxu0 0
        %964 = vmatprep.subr.bf16.mxu0 0
        %965 = vmatpush1.bf16.msra.mxu0 0
        %966 = vmatprep.subr.bf16.mxu0 0
        %967 = vmatpush1.bf16.msra.mxu0 0
        %968 = vmatprep.subr.bf16.mxu0 0
        %969 = vmatpush1.bf16.msra.mxu0 0
        %970 = vmatprep.subr.bf16.mxu0 0
        %971 = vmatpush1.bf16.msra.mxu0 0
        %972 = vmatprep.subr.bf16.mxu0 0
        %973 = vmatpush1.bf16.msra.mxu0 %v956
        %974 = vmatprep.subr.bf16.mxu0 0
        %975 = vmatpush2.bf16.msra.mxu0 0
        %976 = vmatprep.subr.bf16.mxu0 0
        %977 = vmatpush2.bf16.msra.mxu0 0
        %978 = vmatprep.subr.bf16.mxu0 0
        %979 = vmatpush2.bf16.msra.mxu0 0
        %980 = vmatprep.subr.bf16.mxu0 0
        %981 = vmatpush2.bf16.msra.mxu0 0
        %982 = vmatprep.subr.bf16.mxu0 0
        %983 = vmatpush2.bf16.msra.mxu0 0
        %984 = vmatprep.subr.bf16.mxu0 0
        %985 = vmatpush2.bf16.msra.mxu0 0
        %986 = vmatprep.subr.bf16.mxu0 0
        %987 = vmatpush2.bf16.msra.mxu0 0
        %988 = vmatprep.subr.bf16.mxu0 0
        %989 = vmatpush2.bf16.msra.mxu0 0
        %990 = vmatprep.mubr.bf16.mxu0 0
        %991 = vmatmul.mubr.bf16.gmra.mxu0 %v953
        %v992 = vpop.f32.mrf.mxu0
        %v993 = vadd.f32 0.0, %v992
        %v994 = vpop.f32.mrf.mxu0
        %v995 = vpop.f32.mrf.mxu0
        %v996 = vpop.f32.mrf.mxu0
        %997 = vdwg.mxu0
        %v998 = vrcp.pop %v948
        %v999 = vmul.f32 %v993, %v998
        %1000 = vrot.lane.b32.xlu0 %v600, 104
        %v1001 = vpop.permute.xlu0 %1000
        %1002 = vrot.lane.b32.xlu0 %v667, 104
        %v1003 = vpop.permute.xlu0 %1002
        %v1005 = vsel %vm670, %v1001, 0
        %v1008 = vsel %vm670, %v1003, 0
        %1010 = vmatprep.subr.bf16.mxu0 0
        %1011 = vmatpush1.bf16.xpose.msra.mxu0 0
        %1012 = vmatprep.subr.bf16.mxu0 0
        %1013 = vmatpush1.bf16.xpose.msra.mxu0 0
        %1014 = vmatprep.subr.bf16.mxu0 0
        %1015 = vmatpush1.bf16.xpose.msra.mxu0 0
        %1016 = vmatprep.subr.bf16.mxu0 0
        %1017 = vmatpush1.bf16.xpose.msra.mxu0 0
        %1018 = vmatprep.subr.bf16.mxu0 0
        %1019 = vmatpush1.bf16.xpose.msra.mxu0 0
        %1020 = vmatprep.subr.bf16.mxu0 0
        %1021 = vmatpush1.bf16.xpose.msra.mxu0 0
        %1022 = vmatprep.subr.bf16.mxu0 0
        %1023 = vmatpush1.bf16.xpose.msra.mxu0 0
        %1024 = vmatprep.subr.bf16.mxu0 0
        %1025 = vmatpush1.bf16.xpose.msra.mxu0 %v1008
        %1026 = vmatprep.subr.bf16.mxu0 0
        %1027 = vmatpush2.bf16.xpose.msra.mxu0 0
        %1028 = vmatprep.subr.bf16.mxu0 0
        %1029 = vmatpush2.bf16.xpose.msra.mxu0 0
        %1030 = vmatprep.subr.bf16.mxu0 0
        %1031 = vmatpush2.bf16.xpose.msra.mxu0 0
        %1032 = vmatprep.subr.bf16.mxu0 0
        %1033 = vmatpush2.bf16.xpose.msra.mxu0 0
        %1034 = vmatprep.subr.bf16.mxu0 0
        %1035 = vmatpush2.bf16.xpose.msra.mxu0 0
        %1036 = vmatprep.subr.bf16.mxu0 0
        %1037 = vmatpush2.bf16.xpose.msra.mxu0 0
        %1038 = vmatprep.subr.bf16.mxu0 0
        %1039 = vmatpush2.bf16.xpose.msra.mxu0 0
        %1040 = vmatprep.subr.bf16.mxu0 0
        %1041 = vmatpush2.bf16.xpose.msra.mxu0 0
        %1042 = vmatprep.mubr.bf16.mxu0 0
        %1043 = vmatmul.mubr.bf16.gmra.mxu0 %v1005
        %v1044 = vpop.f32.mrf.mxu0
        %v1045 = vadd.f32 %v669, %v1044
        %v1046 = vpop.f32.mrf.mxu0
        %v1047 = vpop.f32.mrf.mxu0
        %v1048 = vpop.f32.mrf.mxu0
        %1049 = vdwg.mxu0
        %v1050 = vsel %vm670, %v1045, -inf
        %1051 = vmax.xlane.f32.xlu0 %v1050
        %v1052 = vpop.xlane.xlu0 %1051
        %v1053 = vsub.f32 %v1045, %v1052
        %v1054 = vmul.f32 %v1053, 1.442695
        %v1055 = vpow.pop %v1054
        %v1056 = vsel %vm670, %v1055, 0.0
        %1057 = vadd.xlane.f32.xlu0 %v1056
        %v1058 = vpop.xlane.xlu0 %1057
        %v1059 = vpack.c.bf16 %v1055, %v1055
        %1060 = vrot.lane.b32.xlu0 %v667, 72
        %v1061 = vpop.permute.xlu0 %1060
        %v1063 = vsel %vm670, %v1059, 0
        %v1066 = vsel %vm733, %v1061, 0
        %1068 = vmatprep.subr.bf16.mxu0 0
        %1069 = vmatpush1.bf16.msra.mxu0 0
        %1070 = vmatprep.subr.bf16.mxu0 0
        %1071 = vmatpush1.bf16.msra.mxu0 0
        %1072 = vmatprep.subr.bf16.mxu0 0
        %1073 = vmatpush1.bf16.msra.mxu0 0
        %1074 = vmatprep.subr.bf16.mxu0 0
        %1075 = vmatpush1.bf16.msra.mxu0 0
        %1076 = vmatprep.subr.bf16.mxu0 0
        %1077 = vmatpush1.bf16.msra.mxu0 0
        %1078 = vmatprep.subr.bf16.mxu0 0
        %1079 = vmatpush1.bf16.msra.mxu0 0
        %1080 = vmatprep.subr.bf16.mxu0 0
        %1081 = vmatpush1.bf16.msra.mxu0 0
        %1082 = vmatprep.subr.bf16.mxu0 0
        %1083 = vmatpush1.bf16.msra.mxu0 %v1066
        %1084 = vmatprep.subr.bf16.mxu0 0
        %1085 = vmatpush2.bf16.msra.mxu0 0
        %1086 = vmatprep.subr.bf16.mxu0 0
        %1087 = vmatpush2.bf16.msra.mxu0 0
        %1088 = vmatprep.subr.bf16.mxu0 0
        %1089 = vmatpush2.bf16.msra.mxu0 0
        %1090 = vmatprep.subr.bf16.mxu0 0
        %1091 = vmatpush2.bf16.msra.mxu0 0
        %1092 = vmatprep.subr.bf16.mxu0 0
        %1093 = vmatpush2.bf16.msra.mxu0 0
        %1094 = vmatprep.subr.bf16.mxu0 0
        %1095 = vmatpush2.bf16.msra.mxu0 0
        %1096 = vmatprep.subr.bf16.mxu0 0
        %1097 = vmatpush2.bf16.msra.mxu0 0
        %1098 = vmatprep.subr.bf16.mxu0 0
        %1099 = vmatpush2.bf16.msra.mxu0 0
        %1100 = vmatprep.mubr.bf16.mxu0 0
        %1101 = vmatmul.mubr.bf16.gmra.mxu0 %v1063
        %v1102 = vpop.f32.mrf.mxu0
        %v1103 = vadd.f32 0.0, %v1102
        %v1104 = vpop.f32.mrf.mxu0
        %v1105 = vpop.f32.mrf.mxu0
        %v1106 = vpop.f32.mrf.mxu0
        %1107 = vdwg.mxu0
        %v1108 = vrcp.pop %v1058
        %v1109 = vmul.f32 %v1103, %v1108
        %1111 = vrot.lane.b32.xlu0 %v889, 8
        %v1112 = vpop.permute.xlu0 %1111
        %1115 = vrot.lane.b32.xlu0 %v999, 16
        %v1116 = vpop.permute.xlu0 %1115
        %1119 = vrot.lane.b32.xlu0 %v1109, 24
        %v1120 = vpop.permute.xlu0 %1119
        %v1122 = vsel %vm670, %v778, %v1112
        %vm1123 = vcmask 130048
        %v1124 = vsel %vm1123, %v1122, %v1116
        %vm1125 = vcmask 195584
        %v1126 = vsel %vm1125, %v1124, %v1120
        %v1127 = vld [vmem:[#allocation2] sm:$0xff]
        %v1128 = vpack.c.bf16 %v1126, %v1126
        %v1129 = vld [vmem:[#allocation12] sm:$0xf]
        %v1130 = vld [vmem:[#allocation12 + $0x4] sm:$0xf]
        %v1131 = vld [vmem:[#allocation12 + $0x8] sm:$0xf]
        %v1132 = vld [vmem:[#allocation12 + $0xc] sm:$0xf]
        %v1137 = vunpack.c.l.b16 %v1129
        %v1138 = vunpack.c.l.b16 %v1130
        %v1139 = vunpack.c.l.b16 %v1131
        %v1140 = vunpack.c.l.b16 %v1132
        %v1141 = vpack.c.b16 %v1138, %v1137
        %v1142 = vpack.c.b16 %v1140, %v1139
        %v1146 = vsel %vm556, %v1128, 0
        %1148 = vmatprep.subr.bf16.mxu0 0
        %1149 = vmatpush1.bf16.msra.mxu0 0
        %1150 = vmatprep.subr.bf16.mxu0 0
        %1151 = vmatpush1.bf16.msra.mxu0 0
        %1152 = vmatprep.subr.bf16.mxu0 0
        %1153 = vmatpush1.bf16.msra.mxu0 0
        %1154 = vmatprep.subr.bf16.mxu0 0
        %1155 = vmatpush1.bf16.msra.mxu0 0
        %1156 = vmatprep.subr.bf16.mxu0 0
        %1157 = vmatpush1.bf16.msra.mxu0 0
        %1158 = vmatprep.subr.bf16.mxu0 0
        %1159 = vmatpush1.bf16.msra.mxu0 0
        %1160 = vmatprep.subr.bf16.mxu0 0
        %1161 = vmatpush1.bf16.msra.mxu0 %v1142
        %1162 = vmatprep.subr.bf16.mxu0 0
        %1163 = vmatpush1.bf16.msra.mxu0 %v1141
        %1164 = vmatprep.subr.bf16.mxu0 0
        %1165 = vmatpush2.bf16.msra.mxu0 0
        %1166 = vmatprep.subr.bf16.mxu0 0
        %1167 = vmatpush2.bf16.msra.mxu0 0
        %1168 = vmatprep.subr.bf16.mxu0 0
        %1169 = vmatpush2.bf16.msra.mxu0 0
        %1170 = vmatprep.subr.bf16.mxu0 0
        %1171 = vmatpush2.bf16.msra.mxu0 0
        %1172 = vmatprep.subr.bf16.mxu0 0
        %1173 = vmatpush2.bf16.msra.mxu0 0
        %1174 = vmatprep.subr.bf16.mxu0 0
        %1175 = vmatpush2.bf16.msra.mxu0 0
        %1176 = vmatprep.subr.bf16.mxu0 0
        %1177 = vmatpush2.bf16.msra.mxu0 0
        %1178 = vmatprep.subr.bf16.mxu0 0
        %1179 = vmatpush2.bf16.msra.mxu0 0
        %1180 = vmatprep.mubr.bf16.mxu0 0
        %1181 = vmatmul.mubr.bf16.gmra.mxu0 %v1146
        %v1182 = vpop.f32.mrf.mxu0
        %v1183 = vadd.f32 0.0, %v1182
        %v1184 = vpop.f32.mrf.mxu0
        %v1185 = vpop.f32.mrf.mxu0
        %v1186 = vpop.f32.mrf.mxu0
        %1187 = vdwg.mxu0
        %v1188 = vadd.f32 %v1127, %v1183
        %1189 = vst.msk [vmem:[#allocation2] sm:$0xff] %vm556, %v1188
        // Predicated region
        $region85: #{tpu_custom_call.1} parent=55 // pred_check
          %p1190 = pneg %p525
        $region86: #{tpu_custom_call.1} parent=55 // pred_check_branch
          %1192 = sbr.rel (%p1190) target = $region88
        $region87: #{tpu_custom_call.1} parent=55 // pred_region
          %v1193 = vld [vmem:[#allocation2] sm:$0xff]
          %v1194 = vld [vmem:[%s8] sm:$0x1]
          %v1196 = vlaneseq
          %v1197 = vshrl.u32 %v1196, 7
          %v1198 = vsub.s32 0, %v1197
          %v1199 = vrot.slane %v1194, %v1198
          %v1201 = vadd.f32 %v1193, %v1199
          %1202 = vst.msk [vmem:[%s517] sm:$0xff] %vm556, %v1201
        $region88: #{tpu_custom_call.1} parent=55 // pred_fallthru
          _
        %s1203 = sand.u32 %s291, 1
        %s1204 = scalar_lea.sflag [#allocation5], %s1203
        %s1205 = sand.u32 %s291, 1
        %s1206 = smul.addr %s1205, 8
        %s1207 = scalar_lea.vmem [#allocation14], %s1206
        // Predicated region
        $region89: #{tpu_custom_call.1} parent=55 // pred_check
          %p1208 = pneg %p301
        $region90: #{tpu_custom_call.1} parent=55 // pred_check_branch
          %1210 = sbr.rel (%p1208) target = $region92
        $region91: #{tpu_custom_call.1} parent=55 // pred_region
          %s1212 = ssub.s32 128, 128
          %1213 = vsyncadd %s1204, %s1212
          %s1214 = sadd.s32 %s37, %s36
          %s1215 = smul.addr %s1214, 128
          %s1216 = scalar_lea.hbm %s9, %s1215
          %s1218 = sshll.u32 %s1207, 4
          %s1219 = int_to_ptr.vmem [resolvable:$true] %s1218
          %1221 = dma.vmem_to_hbm [thread:$0]  %s1219, 128, %s1216, %s1204
        $region92: #{tpu_custom_call.1} parent=55 // pred_fallthru
          _
      $region56: #{tpu_custom_call.1} parent=5 // pred_fallthru
        _
      %p1222 = scmp.le.s32.totalorder 2, %s26
      // Predicated region
      $region93: #{tpu_custom_call.1} parent=5 // pred_check
        %p1223 = pneg %p1222
      $region94: #{tpu_custom_call.1} parent=5 // pred_check_branch
        %1225 = sbr.rel (%p1223) target = $region96
      $region95: #{tpu_custom_call.1} parent=5 // pred_region
        %s1226 = ssub.s32 %s26, 2
        // Predicated region
        $region97: #{tpu_custom_call.1} parent=95 // pred_check
          %p1227 = pneg %p307
        $region98: #{tpu_custom_call.1} parent=95 // pred_check_branch
          %1229 = sbr.rel (%p1227) target = $region100
        $region99: #{tpu_custom_call.1} parent=95 // pred_region
          %s1230 = sand.u32 %s292, 1
          %s1231 = scalar_lea.sflag [#allocation5], %s1230
          %s1232 = sand.u32 %s292, 1
          %s1233 = smul.addr %s1232, 8
          %s1234 = scalar_lea.vmem [#allocation14], %s1233
          %1235 = dma.done %s1231, 128
        $region100: #{tpu_custom_call.1} parent=95 // pred_fallthru
          _
      $region96: #{tpu_custom_call.1} parent=5 // pred_fallthru
        _
    $region6: #{tpu_custom_call.1} parent=1 // loop_footer
      %s30 = sadd.s32 1, %s26
    $region7: #{tpu_custom_call.1} parent=1 // loop_footer_branch
      %25 = sbr.rel target = $region3
    $region8: #{tpu_custom_call.1} parent=1 // loop_exit
      _
    %1236 = vsyncpa [#allocation4], 1
    %s1237 = scalar_lea.sflag [#allocation4], 1
    %1238 = vsyncpa %s1237, 1
    %1239 = vsyncpa [#allocation7], 1
    %s1240 = scalar_lea.sflag [#allocation7], 1
    %1241 = vsyncpa %s1240, 1
    %1242 = vsyncpa [#allocation10], 1
    %1243 = vsyncpa [#allocation13], 1
    %1244 = vsyncpa [#allocation5], 1
    %s1245 = scalar_lea.sflag [#allocation5], 1
    %1246 = vsyncpa %s1245, 1

</llo_original>
